<compile_context>
chip_gen: v5e
topology: v5e:2x2
jax: 0.10.0
libtpu: 0.0.40
codegen_flags: <defaults>
</compile_context>

<pallas_src>
import math

import jax
import jax.numpy as jnp
from jax.experimental import pallas as pl
from jax.experimental.pallas import tpu as pltpu

# ----------------------------- small synthetic config -----------------------
BATCH = 2
SEQ = 8
HIDDEN = 32
NUM_HEADS = 2
HEAD_DIM = HIDDEN // NUM_HEADS
INTER = 64
NUM_LAYERS = 2
VOCAB = 128          # lane-dense (multiple of 128) toy vocab
TYPE_VOCAB = 2
MAX_POS = 32
LN_EPS = 1e-12


# ----------------------------- fused Pallas kernel --------------------------
def _layernorm(x, g, b):
    """LayerNorm over the last dim; all statistics in f32 (v5e-safe)."""
    mean = jnp.mean(x, axis=-1, keepdims=True)
    var = jnp.mean(jnp.square(x - mean), axis=-1, keepdims=True)
    return (x - mean) * jax.lax.rsqrt(var + LN_EPS) * g + b


def _fused_kernel(
    we_ref, tti_ref, mask_ref, det_ref, pos_ref, tt_tab_ref,
    emb_g_ref, emb_b_ref,
    wqkv_ref, bqkv_ref, wo_ref, bo_ref,
    ln1g_ref, ln1b_ref, w1_ref, b1_ref, w2_ref, b2_ref,
    ln2g_ref, ln2b_ref,
    dw_ref, db_ref,
    out_ref,
    x_sc,
):
    f32 = jnp.float32
    bf16 = jnp.bfloat16
    layer = pl.program_id(1)
    last_layer = pl.num_programs(1) - 1

    # ---- first layer step only: embeddings (word + token-type + pos) + LN --
    @pl.when(layer == 0)
    def _():
        tti = tti_ref[0]                                    # (S, 1) f32 in {0., 1.}
        # TYPE_VOCAB == 2 -> gather is a select between the two table rows.
        tok_type = jnp.where(tti == 0.0, tt_tab_ref[0:1, :], tt_tab_ref[1:2, :])
        x0 = we_ref[0] + tok_type + pos_ref[...]            # (S, H) f32
        x_sc[...] = _layernorm(x0, emb_g_ref[...], emb_b_ref[...])

    x = x_sc[...]                                           # residual stream (S, H)
    negm = mask_ref[0]                                      # (1, S) additive key mask

    # ---- encoder layer `layer` (post-LN BERT) -------------------------------
    # Fused QKV projection; the 1/sqrt(HEAD_DIM) scale is pre-folded into the
    # Q columns of wqkv / bqkv (see prepare_params).
    qkv = (jnp.dot(x.astype(bf16), wqkv_ref[0], preferred_element_type=f32)
           + bqkv_ref[0])                                   # (S, 3H) f32
    qkv_bf = qkv.astype(bf16)

    def head_stack(col0):
        # Head-major (NUM_HEADS, S, HEAD_DIM) stack from static lane slices
        # placed on a NEW leading (batch) axis - no lane->sublane transpose.
        return jnp.stack(
            [qkv_bf[:, col0 + hh * HEAD_DIM: col0 + (hh + 1) * HEAD_DIM]
             for hh in range(NUM_HEADS)],
            axis=0)

    q = head_stack(0)
    k = head_stack(HIDDEN)
    v = head_stack(2 * HIDDEN)

    # Head-batched attention: ONE einsum pair per layer (heads = batch dim).
    s = jnp.einsum("hqd,hkd->hqk", q, k,
                   preferred_element_type=f32)              # (NH, S, S) f32
    s = s + negm                                            # broadcast over heads/rows
    s = s - jnp.max(s, axis=-1, keepdims=True)
    p = jnp.exp(s)                                          # softmax math in f32
    # TODO(synk): on v6e/v7x the exp could run in bf16 (~2x EUP) — kept f32 for
    # v5e compatibility and parity.
    p = p * pl.reciprocal(jnp.sum(p, axis=-1, keepdims=True), approx=True)
    ctx = jnp.einsum("hqk,hkd->hqd", p.astype(bf16), v,
                     preferred_element_type=f32)            # (NH, S, HD) f32
    ctx = jnp.concatenate([ctx[hh] for hh in range(NUM_HEADS)], axis=-1)  # (S, H)

    attn = (jnp.dot(ctx.astype(bf16), wo_ref[0], preferred_element_type=f32)
            + bo_ref[0])
    x = _layernorm(attn + x, ln1g_ref[0], ln1b_ref[0])

    ff = jnp.dot(x.astype(bf16), w1_ref[0], preferred_element_type=f32) + b1_ref[0]
    # TODO(synk): HF BERT 'gelu' is the exact erf form; tanh approximation used here.
    ff = jax.nn.gelu(ff, approximate=True)
    ff = jnp.dot(ff.astype(bf16), w2_ref[0], preferred_element_type=f32) + b2_ref[0]
    x = _layernorm(ff + x, ln2g_ref[0], ln2b_ref[0])
    x_sc[...] = x                                           # carry residual to next step

    # ---- last layer step: detect residual add + vocab projection ------------
    @pl.when(layer == last_layer)
    def _():
        hidden = (x + det_ref[0]).astype(bf16)
        # TODO(synk): at real VOCAB=21128 emit bf16 logits and tile dense_w into
        # lane-dense (H, tn) blocks with an explicit vmem_limit_bytes.
        out_ref[0] = (jnp.dot(hidden, dw_ref[...], preferred_element_type=f32)
                      + db_ref[...])


# ----------------------------- parameters -----------------------------------
def init_params(key):
    keys = iter(jax.random.split(key, 8 + NUM_LAYERS * 16))

    def nrm(shape, scale=0.02):
        return scale * jax.random.normal(next(keys), shape, dtype=jnp.float32)

    params = {
        "token_type_emb": nrm((TYPE_VOCAB, HIDDEN)),
        "pos_emb": nrm((MAX_POS, HIDDEN)),
        "emb_ln_g": jnp.ones((HIDDEN,), jnp.float32),
        "emb_ln_b": jnp.zeros((HIDDEN,), jnp.float32),
        "dense_w": nrm((HIDDEN, VOCAB)),
        "dense_b": jnp.zeros((VOCAB,), jnp.float32),
        "layers": [],
    }
    for _ in range(NUM_LAYERS):
        params["layers"].append(
            {
                "wq": nrm((HIDDEN, HIDDEN)), "bq": jnp.zeros((HIDDEN,), jnp.float32),
                "wk": nrm((HIDDEN, HIDDEN)), "bk": jnp.zeros((HIDDEN,), jnp.float32),
                "wv": nrm((HIDDEN, HIDDEN)), "bv": jnp.zeros((HIDDEN,), jnp.float32),
                "wo": nrm((HIDDEN, HIDDEN)), "bo": jnp.zeros((HIDDEN,), jnp.float32),
                "ln1_g": jnp.ones((HIDDEN,), jnp.float32),
                "ln1_b": jnp.zeros((HIDDEN,), jnp.float32),
                "w1": nrm((HIDDEN, INTER)), "b1": jnp.zeros((INTER,), jnp.float32),
                "w2": nrm((INTER, HIDDEN)), "b2": jnp.zeros((HIDDEN,), jnp.float32),
                "ln2_g": jnp.ones((HIDDEN,), jnp.float32),
                "ln2_b": jnp.zeros((HIDDEN,), jnp.float32),
            }
        )
    return params


def prepare_params(params):
    """Stack per-layer weights (leading L axis for the layer grid), fuse QKV,
    fold the attention scale into the Q weight/bias, cast matmul weights bf16."""
    L, H, I, V = NUM_LAYERS, HIDDEN, INTER, VOCAB
    bf = jnp.bfloat16
    scale = 1.0 / math.sqrt(HEAD_DIM)
    layers = params["layers"]
    stk = lambda name: jnp.stack([lyr[name] for lyr in layers])

    wqkv = jnp.stack(
        [jnp.concatenate([lyr["wq"] * scale, lyr["wk"], lyr["wv"]], axis=1)
         for lyr in layers]).astype(bf)                       # (L, H, 3H)
    bqkv = jnp.stack(
        [jnp.concatenate([lyr["bq"] * scale, lyr["bk"], lyr["bv"]], axis=0)
         for lyr in layers]).reshape(L, 1, 3 * H)             # (L, 1, 3H) f32

    return {
        "token_type_emb": params["token_type_emb"],           # (2, H) f32
        "pos_emb": params["pos_emb"],                         # (MAX_POS, H) f32
        "emb_ln_g": params["emb_ln_g"].reshape(1, H),
        "emb_ln_b": params["emb_ln_b"].reshape(1, H),
        "wqkv": wqkv, "bqkv": bqkv,
        "wo": stk("wo").astype(bf), "bo": stk("bo").reshape(L, 1, H),
        "ln1_g": stk("ln1_g").reshape(L, 1, H),
        "ln1_b": stk("ln1_b").reshape(L, 1, H),
        "w1": stk("w1").astype(bf), "b1": stk("b1").reshape(L, 1, I),
        "w2": stk("w2").astype(bf), "b2": stk("b2").reshape(L, 1, H),
        "ln2_g": stk("ln2_g").reshape(L, 1, H),
        "ln2_b": stk("ln2_b").reshape(L, 1, H),
        "dense_w": params["dense_w"].astype(bf),              # (H, V) bf16
        "dense_b": params["dense_b"].reshape(1, V),
    }


# ----------------------------- forward pass ----------------------------------
def correction_network_forward(
    token_type_ids, attention_mask, word_embeddings, detect_hidden_states, pp
):
    b, s, h = word_embeddings.shape

    # Tiny XLA glue: dtype casts + additive mask bias. No (B*S, H) gathered
    # token-type tensor and no B-times tiling of the position table.
    # TODO(synk): tokenizer / pretrained-checkpoint loading
    # (get_inputs_and_word_embeddings) has no Pallas equivalent; synthetic
    # embeddings and weights are used instead.
    tti = token_type_ids.astype(jnp.float32)[..., None]                    # (B, S, 1)
    neg_mask = ((1.0 - attention_mask.astype(jnp.float32)) * -1e9)[:, None, :]  # (B,1,S)
    pos = pp["pos_emb"][:s]                                                # (S, H)

    args = (
        word_embeddings, tti, neg_mask, detect_hidden_states, pos,
        pp["token_type_emb"], pp["emb_ln_g"], pp["emb_ln_b"],
        pp["wqkv"], pp["bqkv"], pp["wo"], pp["bo"],
        pp["ln1_g"], pp["ln1_b"], pp["w1"], pp["b1"], pp["w2"], pp["b2"],
        pp["ln2_g"], pp["ln2_b"],
        pp["dense_w"], pp["dense_b"],
    )

    bmap = lambda bb, ll: (bb, 0, 0)     # per-batch blocks (ignore layer axis)
    lmap = lambda bb, ll: (ll, 0, 0)     # per-layer weight blocks
    z2 = lambda bb, ll: (0, 0)           # shared / resident blocks

    in_specs = [
        pl.BlockSpec((1, s, h), bmap),            # word embeddings
        pl.BlockSpec((1, s, 1), bmap),            # token-type ids (as f32)
        pl.BlockSpec((1, 1, s), bmap),            # additive attention-mask bias
        pl.BlockSpec((1, s, h), bmap),            # detect hidden states
        pl.BlockSpec((s, h), z2),                 # position table (shared, no tiling)
        pl.BlockSpec((TYPE_VOCAB, h), z2),        # token-type table
        pl.BlockSpec((1, h), z2),                 # emb LN gamma
        pl.BlockSpec((1, h), z2),                 # emb LN beta
        pl.BlockSpec((1, h, 3 * h), lmap),        # fused QKV weight (layer l)
        pl.BlockSpec((1, 1, 3 * h), lmap),        # fused QKV bias
        pl.BlockSpec((1, h, h), lmap),            # attn out-proj weight
        pl.BlockSpec((1, 1, h), lmap),            # attn out-proj bias
        pl.BlockSpec((1, 1, h), lmap),            # LN1 gamma
        pl.BlockSpec((1, 1, h), lmap),            # LN1 beta
        pl.BlockSpec((1, h, INTER), lmap),        # FFN W1
        pl.BlockSpec((1, 1, INTER), lmap),        # FFN b1
        pl.BlockSpec((1, INTER, h), lmap),        # FFN W2
        pl.BlockSpec((1, 1, h), lmap),            # FFN b2
        pl.BlockSpec((1, 1, h), lmap),            # LN2 gamma
        pl.BlockSpec((1, 1, h), lmap),            # LN2 beta
        pl.BlockSpec((h, VOCAB), z2),             # vocab projection weight
        pl.BlockSpec((1, VOCAB), z2),             # vocab projection bias
    ]

    # Advisory cost estimate so XLA schedules the surrounding glue correctly.
    m = b * s
    flops = NUM_LAYERS * (
        2 * m * h * 3 * h + 4 * m * s * h + 2 * m * h * h + 4 * m * h * INTER
    ) + 2 * m * h * VOCAB
    transcendentals = NUM_LAYERS * (b * NUM_HEADS * s * s + m * INTER)
    bytes_accessed = (sum(int(a.size) * a.dtype.itemsize for a in args)
                      + m * VOCAB * 4)

    logits = pl.pallas_call(
        _fused_kernel,
        out_shape=jax.ShapeDtypeStruct((b, s, VOCAB), jnp.float32),
        grid_spec=pltpu.PrefetchScalarGridSpec(
            num_scalar_prefetch=0,
            grid=(b, NUM_LAYERS),                 # batch (parallel) x layer (arbitrary)
            in_specs=in_specs,
            out_specs=pl.BlockSpec((1, s, VOCAB), bmap),
            scratch_shapes=[pltpu.VMEM((s, h), jnp.float32)],   # residual carry
        ),
        compiler_params=pltpu.CompilerParams(
            dimension_semantics=("parallel", "arbitrary")),
        cost_estimate=pl.CostEstimate(
            flops=flops, transcendentals=transcendentals,
            bytes_accessed=bytes_accessed),
    )(*args)
    return logits


# ----------------------------- driver ----------------------------------------
if __name__ == "__main__":
    key = jax.random.PRNGKey(0)
    k_params, k_we, k_det = jax.random.split(key, 3)

    packed = prepare_params(init_params(k_params))

    token_type_ids = jnp.zeros((BATCH, SEQ), dtype=jnp.int32)
    attention_mask = jnp.array(
        [[1] * SEQ, [1] * (SEQ - 2) + [0, 0]], dtype=jnp.int32
    )
    word_embeddings = 0.02 * jax.random.normal(
        k_we, (BATCH, SEQ, HIDDEN), dtype=jnp.float32
    )
    detect_hidden_states = 0.02 * jax.random.normal(
        k_det, (BATCH, SEQ, HIDDEN), dtype=jnp.float32
    )

    fwd = jax.jit(
        lambda tti, am, we, dh: correction_network_forward(tti, am, we, dh, packed)
    )
    logits = fwd(token_type_ids, attention_mask, word_embeddings, detect_hidden_states)
    logits = jax.block_until_ready(logits)

    assert logits.shape == (BATCH, SEQ, VOCAB)
    assert bool(jnp.all(jnp.isfinite(logits)))
    print("KERNEL_OK")
</pallas_src>

<mosaic_0001>
module attributes {stable_mosaic.version = 11 : i64} {
  func.func @_fused_kernel(%arg0: i32, %arg1: i32, %arg2: memref<1x8x32xf32, #tpu.memory_space<vmem>>, %arg3: memref<1x8x1xf32, #tpu.memory_space<vmem>>, %arg4: memref<1x1x8xf32, #tpu.memory_space<vmem>>, %arg5: memref<1x8x32xf32, #tpu.memory_space<vmem>>, %arg6: memref<8x32xf32, #tpu.memory_space<vmem>>, %arg7: memref<2x32xf32, #tpu.memory_space<vmem>>, %arg8: memref<1x32xf32, #tpu.memory_space<vmem>>, %arg9: memref<1x32xf32, #tpu.memory_space<vmem>>, %arg10: memref<1x32x96xbf16, #tpu.memory_space<vmem>>, %arg11: memref<1x1x96xf32, #tpu.memory_space<vmem>>, %arg12: memref<1x32x32xbf16, #tpu.memory_space<vmem>>, %arg13: memref<1x1x32xf32, #tpu.memory_space<vmem>>, %arg14: memref<1x1x32xf32, #tpu.memory_space<vmem>>, %arg15: memref<1x1x32xf32, #tpu.memory_space<vmem>>, %arg16: memref<1x32x64xbf16, #tpu.memory_space<vmem>>, %arg17: memref<1x1x64xf32, #tpu.memory_space<vmem>>, %arg18: memref<1x64x32xbf16, #tpu.memory_space<vmem>>, %arg19: memref<1x1x32xf32, #tpu.memory_space<vmem>>, %arg20: memref<1x1x32xf32, #tpu.memory_space<vmem>>, %arg21: memref<1x1x32xf32, #tpu.memory_space<vmem>>, %arg22: memref<32x128xbf16, #tpu.memory_space<vmem>>, %arg23: memref<1x128xf32, #tpu.memory_space<vmem>>, %arg24: memref<1x8x128xf32, #tpu.memory_space<vmem>>, %arg25: memref<8x32xf32, #tpu.memory_space<vmem>>) attributes {dimension_semantics = [#tpu.dimension_semantics<parallel>, #tpu.dimension_semantics<arbitrary>], iteration_bounds = array<i64: 2, 2>, scalar_prefetch = 0 : i64, scratch_operands = 1 : i64, tpu.core_type = #tpu.core_type<tc>, window_params = [{transform_indices = @transform_0, window_bounds = array<i64: 1, 8, 32>}, {transform_indices = @transform_1, window_bounds = array<i64: 1, 8, 1>}, {transform_indices = @transform_2, window_bounds = array<i64: 1, 1, 8>}, {transform_indices = @transform_3, window_bounds = array<i64: 1, 8, 32>}, {pipeline_mode = #tpu.pipeline_mode<synchronous>, transform_indices = @transform_4, window_bounds = array<i64: 8, 32>}, {pipeline_mode = #tpu.pipeline_mode<synchronous>, transform_indices = @transform_5, window_bounds = array<i64: 2, 32>}, {pipeline_mode = #tpu.pipeline_mode<synchronous>, transform_indices = @transform_6, window_bounds = array<i64: 1, 32>}, {pipeline_mode = #tpu.pipeline_mode<synchronous>, transform_indices = @transform_7, window_bounds = array<i64: 1, 32>}, {transform_indices = @transform_8, window_bounds = array<i64: 1, 32, 96>}, {transform_indices = @transform_9, window_bounds = array<i64: 1, 1, 96>}, {transform_indices = @transform_10, window_bounds = array<i64: 1, 32, 32>}, {transform_indices = @transform_11, window_bounds = array<i64: 1, 1, 32>}, {transform_indices = @transform_12, window_bounds = array<i64: 1, 1, 32>}, {transform_indices = @transform_13, window_bounds = array<i64: 1, 1, 32>}, {transform_indices = @transform_14, window_bounds = array<i64: 1, 32, 64>}, {transform_indices = @transform_15, window_bounds = array<i64: 1, 1, 64>}, {transform_indices = @transform_16, window_bounds = array<i64: 1, 64, 32>}, {transform_indices = @transform_17, window_bounds = array<i64: 1, 1, 32>}, {transform_indices = @transform_18, window_bounds = array<i64: 1, 1, 32>}, {transform_indices = @transform_19, window_bounds = array<i64: 1, 1, 32>}, {pipeline_mode = #tpu.pipeline_mode<synchronous>, transform_indices = @transform_20, window_bounds = array<i64: 32, 128>}, {pipeline_mode = #tpu.pipeline_mode<synchronous>, transform_indices = @transform_21, window_bounds = array<i64: 1, 128>}, {transform_indices = @transform_22, window_bounds = array<i64: 1, 8, 128>}]} {
    %c0_i32 = arith.constant 0 : i32
    %0 = arith.cmpi eq, %arg1, %c0_i32 : i32
    %1 = arith.extui %0 : i1 to i32
    %c0_i32_0 = arith.constant 0 : i32
    %2 = arith.cmpi ne, %1, %c0_i32_0 : i32
    scf.if %2 {
      %c0_65 = arith.constant 0 : index
      %c0_66 = arith.constant 0 : index
      %c0_67 = arith.constant 0 : index
      %146 = vector.load %arg3[%c0_65, %c0_66, %c0_67] : memref<1x8x1xf32, #tpu.memory_space<vmem>>, vector<1x8x1xf32>
      %147 = vector.shape_cast %146 : vector<1x8x1xf32> to vector<8x1xf32>
      %cst_68 = arith.constant 0.000000e+00 : f32
      %148 = vector.broadcast %cst_68 : f32 to vector<8x1xf32>
      %149 = arith.cmpf oeq, %147, %148 : vector<8x1xf32>
      %c0_69 = arith.constant 0 : index
      %c0_70 = arith.constant 0 : index
      %150 = vector.load %arg7[%c0_69, %c0_70] : memref<2x32xf32, #tpu.memory_space<vmem>>, vector<1x32xf32>
      %c1 = arith.constant 1 : index
      %c0_71 = arith.constant 0 : index
      %151 = vector.load %arg7[%c1, %c0_71] : memref<2x32xf32, #tpu.memory_space<vmem>>, vector<1x32xf32>
      %152 = vector.shape_cast %149 : vector<8x1xi1> to vector<8x1xi1>
      %153 = vector.broadcast %152 : vector<8x1xi1> to vector<8x32xi1>
      %154 = vector.shape_cast %150 : vector<1x32xf32> to vector<1x32xf32>
      %155 = vector.broadcast %154 : vector<1x32xf32> to vector<8x32xf32>
      %156 = vector.shape_cast %151 : vector<1x32xf32> to vector<1x32xf32>
      %157 = vector.broadcast %156 : vector<1x32xf32> to vector<8x32xf32>
      %158 = arith.select %153, %155, %157 : vector<8x32xi1>, vector<8x32xf32>
      %c0_72 = arith.constant 0 : index
      %c0_73 = arith.constant 0 : index
      %c0_74 = arith.constant 0 : index
      %159 = vector.load %arg2[%c0_72, %c0_73, %c0_74] : memref<1x8x32xf32, #tpu.memory_space<vmem>>, vector<1x8x32xf32>
      %160 = vector.shape_cast %159 : vector<1x8x32xf32> to vector<8x32xf32>
      %161 = arith.addf %160, %158 : vector<8x32xf32>
      %c0_75 = arith.constant 0 : index
      %c0_76 = arith.constant 0 : index
      %162 = vector.load %arg6[%c0_75, %c0_76] : memref<8x32xf32, #tpu.memory_space<vmem>>, vector<8x32xf32>
      %163 = arith.addf %161, %162 : vector<8x32xf32>
      %c0_77 = arith.constant 0 : index
      %c0_78 = arith.constant 0 : index
      %164 = vector.load %arg8[%c0_77, %c0_78] : memref<1x32xf32, #tpu.memory_space<vmem>>, vector<1x32xf32>
      %c0_79 = arith.constant 0 : index
      %c0_80 = arith.constant 0 : index
      %165 = vector.load %arg9[%c0_79, %c0_80] : memref<1x32xf32, #tpu.memory_space<vmem>>, vector<1x32xf32>
      %cst_81 = arith.constant dense<0.000000e+00> : vector<8xf32>
      %166 = vector.multi_reduction <add>, %163, %cst_81 [1] : vector<8x32xf32> to vector<8xf32>
      %167 = vector.shape_cast %166 : vector<8xf32> to vector<8x1xf32>
      %cst_82 = arith.constant 3.200000e+01 : f32
      %168 = vector.broadcast %cst_82 : f32 to vector<8x1xf32>
      %169 = arith.divf %167, %168 : vector<8x1xf32>
      %170 = vector.broadcast %169 : vector<8x1xf32> to vector<8x32xf32>
      %171 = arith.subf %163, %170 : vector<8x32xf32>
      %172 = arith.mulf %171, %171 : vector<8x32xf32>
      %cst_83 = arith.constant dense<0.000000e+00> : vector<8xf32>
      %173 = vector.multi_reduction <add>, %172, %cst_83 [1] : vector<8x32xf32> to vector<8xf32>
      %174 = vector.shape_cast %173 : vector<8xf32> to vector<8x1xf32>
      %cst_84 = arith.constant 3.200000e+01 : f32
      %175 = vector.broadcast %cst_84 : f32 to vector<8x1xf32>
      %176 = arith.divf %174, %175 : vector<8x1xf32>
      %177 = vector.broadcast %169 : vector<8x1xf32> to vector<8x32xf32>
      %178 = arith.subf %163, %177 : vector<8x32xf32>
      %cst_85 = arith.constant 9.99999996E-13 : f32
      %179 = vector.broadcast %cst_85 : f32 to vector<8x1xf32>
      %180 = arith.addf %176, %179 : vector<8x1xf32>
      %181 = math.rsqrt %180 : vector<8x1xf32>
      %182 = vector.broadcast %181 : vector<8x1xf32> to vector<8x32xf32>
      %183 = arith.mulf %178, %182 : vector<8x32xf32>
      %184 = vector.broadcast %164 : vector<1x32xf32> to vector<8x32xf32>
      %185 = arith.mulf %183, %184 : vector<8x32xf32>
      %186 = vector.broadcast %165 : vector<1x32xf32> to vector<8x32xf32>
      %187 = arith.addf %185, %186 : vector<8x32xf32>
      %c0_86 = arith.constant 0 : index
      %c0_87 = arith.constant 0 : index
      %188 = vector.load %arg25[%c0_86, %c0_87] : memref<8x32xf32, #tpu.memory_space<vmem>>, vector<8x32xf32>
      tpu.vector_store %arg25[%c0_86, %c0_87], %187 {strides = array<i32>} : memref<8x32xf32, #tpu.memory_space<vmem>>, vector<8x32xf32>,
    } else {
    }
    %c0 = arith.constant 0 : index
    %c0_1 = arith.constant 0 : index
    %3 = vector.load %arg25[%c0, %c0_1] : memref<8x32xf32, #tpu.memory_space<vmem>>, vector<8x32xf32>
    %c0_2 = arith.constant 0 : index
    %c0_3 = arith.constant 0 : index
    %c0_4 = arith.constant 0 : index
    %4 = vector.load %arg4[%c0_2, %c0_3, %c0_4] : memref<1x1x8xf32, #tpu.memory_space<vmem>>, vector<1x1x8xf32>
    %5 = vector.shape_cast %4 : vector<1x1x8xf32> to vector<1x8xf32>
    %6 = arith.truncf %3 : vector<8x32xf32> to vector<8x32xbf16>
    %c0_5 = arith.constant 0 : index
    %c0_6 = arith.constant 0 : index
    %c0_7 = arith.constant 0 : index
    %7 = vector.load %arg10[%c0_5, %c0_6, %c0_7] : memref<1x32x96xbf16, #tpu.memory_space<vmem>>, vector<1x32x96xbf16>
    %8 = vector.shape_cast %7 : vector<1x32x96xbf16> to vector<32x96xbf16>
    %cst = arith.constant dense<0.000000e+00> : vector<8x96xf32>
    %9 = tpu.matmul %6, %8, %cst {dimension_numbers = #tpu.dot_dimension_numbers<[1], [0], [0], [1], [0, 0, 1, 1], [], []>} : vector<8x32xbf16>, vector<32x96xbf16>, vector<8x96xf32> -> vector<8x96xf32>
    %c0_8 = arith.constant 0 : index
    %c0_9 = arith.constant 0 : index
    %c0_10 = arith.constant 0 : index
    %10 = vector.load %arg11[%c0_8, %c0_9, %c0_10] : memref<1x1x96xf32, #tpu.memory_space<vmem>>, vector<1x1x96xf32>
    %11 = vector.shape_cast %10 : vector<1x1x96xf32> to vector<1x96xf32>
    %12 = vector.broadcast %11 : vector<1x96xf32> to vector<8x96xf32>
    %13 = arith.addf %9, %12 : vector<8x96xf32>
    %14 = arith.truncf %13 : vector<8x96xf32> to vector<8x96xbf16>
    %15 = vector.extract_strided_slice %14 {offsets = [0, 0], sizes = [8, 16], strides = [1, 1]} : vector<8x96xbf16> to vector<8x16xbf16>
    %16 = vector.extract_strided_slice %14 {offsets = [0, 16], sizes = [8, 16], strides = [1, 1]} : vector<8x96xbf16> to vector<8x16xbf16>
    %17 = vector.shape_cast %15 : vector<8x16xbf16> to vector<1x8x16xbf16>
    %18 = vector.shape_cast %16 : vector<8x16xbf16> to vector<1x8x16xbf16>
    %19 = tpu.concatenate %17, %18 in 0 : vector<1x8x16xbf16>, vector<1x8x16xbf16> -> vector<2x8x16xbf16>
    %20 = vector.extract_strided_slice %14 {offsets = [0, 32], sizes = [8, 16], strides = [1, 1]} : vector<8x96xbf16> to vector<8x16xbf16>
    %21 = vector.extract_strided_slice %14 {offsets = [0, 48], sizes = [8, 16], strides = [1, 1]} : vector<8x96xbf16> to vector<8x16xbf16>
    %22 = vector.shape_cast %20 : vector<8x16xbf16> to vector<1x8x16xbf16>
    %23 = vector.shape_cast %21 : vector<8x16xbf16> to vector<1x8x16xbf16>
    %24 = tpu.concatenate %22, %23 in 0 : vector<1x8x16xbf16>, vector<1x8x16xbf16> -> vector<2x8x16xbf16>
    %25 = vector.extract_strided_slice %14 {offsets = [0, 64], sizes = [8, 16], strides = [1, 1]} : vector<8x96xbf16> to vector<8x16xbf16>
    %26 = vector.extract_strided_slice %14 {offsets = [0, 80], sizes = [8, 16], strides = [1, 1]} : vector<8x96xbf16> to vector<8x16xbf16>
    %27 = vector.shape_cast %25 : vector<8x16xbf16> to vector<1x8x16xbf16>
    %28 = vector.shape_cast %26 : vector<8x16xbf16> to vector<1x8x16xbf16>
    %29 = tpu.concatenate %27, %28 in 0 : vector<1x8x16xbf16>, vector<1x8x16xbf16> -> vector<2x8x16xbf16>
    "tpu.trace_start"() <{level = 10 : i32, message = "hqd,hkd->hqk"}> : () -> ()
    %cst_11 = arith.constant dense<0.000000e+00> : vector<2x8x8xf32>
    %30 = tpu.matmul %19, %24, %cst_11 {dimension_numbers = #tpu.dot_dimension_numbers<[2], [2], [1], [1], [0, 0, 0, 1, 1, 1], [0], [0]>} : vector<2x8x16xbf16>, vector<2x8x16xbf16>, vector<2x8x8xf32> -> vector<2x8x8xf32>
    "tpu.trace_stop"() : () -> ()
    %31 = vector.shape_cast %5 : vector<1x8xf32> to vector<1x1x8xf32>
    %32 = vector.broadcast %31 : vector<1x1x8xf32> to vector<2x8x8xf32>
    %33 = arith.addf %30, %32 : vector<2x8x8xf32>
    %cst_12 = arith.constant dense<0xFF800000> : vector<2x8xf32>
    %34 = vector.multi_reduction <maximumf>, %33, %cst_12 [2] : vector<2x8x8xf32> to vector<2x8xf32>
    %35 = vector.shape_cast %34 : vector<2x8xf32> to vector<2x8x1xf32>
    %36 = vector.broadcast %35 : vector<2x8x1xf32> to vector<2x8x8xf32>
    %37 = arith.subf %33, %36 : vector<2x8x8xf32>
    %38 = math.exp %37 : vector<2x8x8xf32>
    %cst_13 = arith.constant dense<0.000000e+00> : vector<2x8xf32>
    %39 = vector.multi_reduction <add>, %38, %cst_13 [2] : vector<2x8x8xf32> to vector<2x8xf32>
    %40 = vector.shape_cast %39 : vector<2x8xf32> to vector<2x8x1xf32>
    %41 = tpu.reciprocal %40 {approx = true} : vector<2x8x1xf32> -> vector<2x8x1xf32>
    %42 = vector.broadcast %41 : vector<2x8x1xf32> to vector<2x8x8xf32>
    %43 = arith.mulf %38, %42 : vector<2x8x8xf32>
    %44 = arith.truncf %43 : vector<2x8x8xf32> to vector<2x8x8xbf16>
    "tpu.trace_start"() <{level = 10 : i32, message = "hqk,hkd->hqd"}> : () -> ()
    %cst_14 = arith.constant dense<0.000000e+00> : vector<2x8x16xf32>
    %45 = tpu.matmul %44, %29, %cst_14 {dimension_numbers = #tpu.dot_dimension_numbers<[2], [1], [1], [2], [0, 0, 0, 1, 1, 2], [0], [0]>} : vector<2x8x8xbf16>, vector<2x8x16xbf16>, vector<2x8x16xf32> -> vector<2x8x16xf32>
    "tpu.trace_stop"() : () -> ()
    %46 = vector.extract_strided_slice %45 {offsets = [0, 0, 0], sizes = [1, 8, 16], strides = [1, 1, 1]} : vector<2x8x16xf32> to vector<1x8x16xf32>
    %47 = vector.shape_cast %46 : vector<1x8x16xf32> to vector<8x16xf32>
    %48 = vector.extract_strided_slice %45 {offsets = [1, 0, 0], sizes = [1, 8, 16], strides = [1, 1, 1]} : vector<2x8x16xf32> to vector<1x8x16xf32>
    %49 = vector.shape_cast %48 : vector<1x8x16xf32> to vector<8x16xf32>
    %50 = tpu.concatenate %47, %49 in 1 : vector<8x16xf32>, vector<8x16xf32> -> vector<8x32xf32>
    %51 = arith.truncf %50 : vector<8x32xf32> to vector<8x32xbf16>
    %c0_15 = arith.constant 0 : index
    %c0_16 = arith.constant 0 : index
    %c0_17 = arith.constant 0 : index
    %52 = vector.load %arg12[%c0_15, %c0_16, %c0_17] : memref<1x32x32xbf16, #tpu.memory_space<vmem>>, vector<1x32x32xbf16>
    %53 = vector.shape_cast %52 : vector<1x32x32xbf16> to vector<32x32xbf16>
    %cst_18 = arith.constant dense<0.000000e+00> : vector<8x32xf32>
    %54 = tpu.matmul %51, %53, %cst_18 {dimension_numbers = #tpu.dot_dimension_numbers<[1], [0], [0], [1], [0, 0, 1, 1], [], []>} : vector<8x32xbf16>, vector<32x32xbf16>, vector<8x32xf32> -> vector<8x32xf32>
    %c0_19 = arith.constant 0 : index
    %c0_20 = arith.constant 0 : index
    %c0_21 = arith.constant 0 : index
    %55 = vector.load %arg13[%c0_19, %c0_20, %c0_21] : memref<1x1x32xf32, #tpu.memory_space<vmem>>, vector<1x1x32xf32>
    %56 = vector.shape_cast %55 : vector<1x1x32xf32> to vector<1x32xf32>
    %57 = vector.broadcast %56 : vector<1x32xf32> to vector<8x32xf32>
    %58 = arith.addf %54, %57 : vector<8x32xf32>
    %59 = arith.addf %58, %3 : vector<8x32xf32>
    %c0_22 = arith.constant 0 : index
    %c0_23 = arith.constant 0 : index
    %c0_24 = arith.constant 0 : index
    %60 = vector.load %arg14[%c0_22, %c0_23, %c0_24] : memref<1x1x32xf32, #tpu.memory_space<vmem>>, vector<1x1x32xf32>
    %61 = vector.shape_cast %60 : vector<1x1x32xf32> to vector<1x32xf32>
    %c0_25 = arith.constant 0 : index
    %c0_26 = arith.constant 0 : index
    %c0_27 = arith.constant 0 : index
    %62 = vector.load %arg15[%c0_25, %c0_26, %c0_27] : memref<1x1x32xf32, #tpu.memory_space<vmem>>, vector<1x1x32xf32>
    %63 = vector.shape_cast %62 : vector<1x1x32xf32> to vector<1x32xf32>
    %cst_28 = arith.constant dense<0.000000e+00> : vector<8xf32>
    %64 = vector.multi_reduction <add>, %59, %cst_28 [1] : vector<8x32xf32> to vector<8xf32>
    %65 = vector.shape_cast %64 : vector<8xf32> to vector<8x1xf32>
    %cst_29 = arith.constant 3.200000e+01 : f32
    %66 = vector.broadcast %cst_29 : f32 to vector<8x1xf32>
    %67 = arith.divf %65, %66 : vector<8x1xf32>
    %68 = vector.broadcast %67 : vector<8x1xf32> to vector<8x32xf32>
    %69 = arith.subf %59, %68 : vector<8x32xf32>
    %70 = arith.mulf %69, %69 : vector<8x32xf32>
    %cst_30 = arith.constant dense<0.000000e+00> : vector<8xf32>
    %71 = vector.multi_reduction <add>, %70, %cst_30 [1] : vector<8x32xf32> to vector<8xf32>
    %72 = vector.shape_cast %71 : vector<8xf32> to vector<8x1xf32>
    %cst_31 = arith.constant 3.200000e+01 : f32
    %73 = vector.broadcast %cst_31 : f32 to vector<8x1xf32>
    %74 = arith.divf %72, %73 : vector<8x1xf32>
    %75 = vector.broadcast %67 : vector<8x1xf32> to vector<8x32xf32>
    %76 = arith.subf %59, %75 : vector<8x32xf32>
    %cst_32 = arith.constant 9.99999996E-13 : f32
    %77 = vector.broadcast %cst_32 : f32 to vector<8x1xf32>
    %78 = arith.addf %74, %77 : vector<8x1xf32>
    %79 = math.rsqrt %78 : vector<8x1xf32>
    %80 = vector.broadcast %79 : vector<8x1xf32> to vector<8x32xf32>
    %81 = arith.mulf %76, %80 : vector<8x32xf32>
    %82 = vector.broadcast %61 : vector<1x32xf32> to vector<8x32xf32>
    %83 = arith.mulf %81, %82 : vector<8x32xf32>
    %84 = vector.broadcast %63 : vector<1x32xf32> to vector<8x32xf32>
    %85 = arith.addf %83, %84 : vector<8x32xf32>
    %86 = arith.truncf %85 : vector<8x32xf32> to vector<8x32xbf16>
    %c0_33 = arith.constant 0 : index
    %c0_34 = arith.constant 0 : index
    %c0_35 = arith.constant 0 : index
    %87 = vector.load %arg16[%c0_33, %c0_34, %c0_35] : memref<1x32x64xbf16, #tpu.memory_space<vmem>>, vector<1x32x64xbf16>
    %88 = vector.shape_cast %87 : vector<1x32x64xbf16> to vector<32x64xbf16>
    %cst_36 = arith.constant dense<0.000000e+00> : vector<8x64xf32>
    %89 = tpu.matmul %86, %88, %cst_36 {dimension_numbers = #tpu.dot_dimension_numbers<[1], [0], [0], [1], [0, 0, 1, 1], [], []>} : vector<8x32xbf16>, vector<32x64xbf16>, vector<8x64xf32> -> vector<8x64xf32>
    %c0_37 = arith.constant 0 : index
    %c0_38 = arith.constant 0 : index
    %c0_39 = arith.constant 0 : index
    %90 = vector.load %arg17[%c0_37, %c0_38, %c0_39] : memref<1x1x64xf32, #tpu.memory_space<vmem>>, vector<1x1x64xf32>
    %91 = vector.shape_cast %90 : vector<1x1x64xf32> to vector<1x64xf32>
    %92 = vector.broadcast %91 : vector<1x64xf32> to vector<8x64xf32>
    %93 = arith.addf %89, %92 : vector<8x64xf32>
    %94 = arith.mulf %93, %93 : vector<8x64xf32>
    %95 = arith.mulf %93, %94 : vector<8x64xf32>
    %cst_40 = arith.constant 4.471500e-02 : f32
    %96 = vector.broadcast %cst_40 : f32 to vector<8x64xf32>
    %97 = arith.mulf %96, %95 : vector<8x64xf32>
    %98 = arith.addf %93, %97 : vector<8x64xf32>
    %cst_41 = arith.constant 0.797884583 : f32
    %99 = vector.broadcast %cst_41 : f32 to vector<8x64xf32>
    %100 = arith.mulf %99, %98 : vector<8x64xf32>
    %101 = math.tanh %100 : vector<8x64xf32>
    %cst_42 = arith.constant 1.000000e+00 : f32
    %102 = vector.broadcast %cst_42 : f32 to vector<8x64xf32>
    %103 = arith.addf %102, %101 : vector<8x64xf32>
    %cst_43 = arith.constant 5.000000e-01 : f32
    %104 = vector.broadcast %cst_43 : f32 to vector<8x64xf32>
    %105 = arith.mulf %104, %103 : vector<8x64xf32>
    %106 = arith.mulf %93, %105 : vector<8x64xf32>
    %107 = arith.truncf %106 : vector<8x64xf32> to vector<8x64xbf16>
    %c0_44 = arith.constant 0 : index
    %c0_45 = arith.constant 0 : index
    %c0_46 = arith.constant 0 : index
    %108 = vector.load %arg18[%c0_44, %c0_45, %c0_46] : memref<1x64x32xbf16, #tpu.memory_space<vmem>>, vector<1x64x32xbf16>
    %109 = vector.shape_cast %108 : vector<1x64x32xbf16> to vector<64x32xbf16>
    %cst_47 = arith.constant dense<0.000000e+00> : vector<8x32xf32>
    %110 = tpu.matmul %107, %109, %cst_47 {dimension_numbers = #tpu.dot_dimension_numbers<[1], [0], [0], [1], [0, 0, 1, 1], [], []>} : vector<8x64xbf16>, vector<64x32xbf16>, vector<8x32xf32> -> vector<8x32xf32>
    %c0_48 = arith.constant 0 : index
    %c0_49 = arith.constant 0 : index
    %c0_50 = arith.constant 0 : index
    %111 = vector.load %arg19[%c0_48, %c0_49, %c0_50] : memref<1x1x32xf32, #tpu.memory_space<vmem>>, vector<1x1x32xf32>
    %112 = vector.shape_cast %111 : vector<1x1x32xf32> to vector<1x32xf32>
    %113 = vector.broadcast %112 : vector<1x32xf32> to vector<8x32xf32>
    %114 = arith.addf %110, %113 : vector<8x32xf32>
    %115 = arith.addf %114, %85 : vector<8x32xf32>
    %c0_51 = arith.constant 0 : index
    %c0_52 = arith.constant 0 : index
    %c0_53 = arith.constant 0 : index
    %116 = vector.load %arg20[%c0_51, %c0_52, %c0_53] : memref<1x1x32xf32, #tpu.memory_space<vmem>>, vector<1x1x32xf32>
    %117 = vector.shape_cast %116 : vector<1x1x32xf32> to vector<1x32xf32>
    %c0_54 = arith.constant 0 : index
    %c0_55 = arith.constant 0 : index
    %c0_56 = arith.constant 0 : index
    %118 = vector.load %arg21[%c0_54, %c0_55, %c0_56] : memref<1x1x32xf32, #tpu.memory_space<vmem>>, vector<1x1x32xf32>
    %119 = vector.shape_cast %118 : vector<1x1x32xf32> to vector<1x32xf32>
    %cst_57 = arith.constant dense<0.000000e+00> : vector<8xf32>
    %120 = vector.multi_reduction <add>, %115, %cst_57 [1] : vector<8x32xf32> to vector<8xf32>
    %121 = vector.shape_cast %120 : vector<8xf32> to vector<8x1xf32>
    %cst_58 = arith.constant 3.200000e+01 : f32
    %122 = vector.broadcast %cst_58 : f32 to vector<8x1xf32>
    %123 = arith.divf %121, %122 : vector<8x1xf32>
    %124 = vector.broadcast %123 : vector<8x1xf32> to vector<8x32xf32>
    %125 = arith.subf %115, %124 : vector<8x32xf32>
    %126 = arith.mulf %125, %125 : vector<8x32xf32>
    %cst_59 = arith.constant dense<0.000000e+00> : vector<8xf32>
    %127 = vector.multi_reduction <add>, %126, %cst_59 [1] : vector<8x32xf32> to vector<8xf32>
    %128 = vector.shape_cast %127 : vector<8xf32> to vector<8x1xf32>
    %cst_60 = arith.constant 3.200000e+01 : f32
    %129 = vector.broadcast %cst_60 : f32 to vector<8x1xf32>
    %130 = arith.divf %128, %129 : vector<8x1xf32>
    %131 = vector.broadcast %123 : vector<8x1xf32> to vector<8x32xf32>
    %132 = arith.subf %115, %131 : vector<8x32xf32>
    %cst_61 = arith.constant 9.99999996E-13 : f32
    %133 = vector.broadcast %cst_61 : f32 to vector<8x1xf32>
    %134 = arith.addf %130, %133 : vector<8x1xf32>
    %135 = math.rsqrt %134 : vector<8x1xf32>
    %136 = vector.broadcast %135 : vector<8x1xf32> to vector<8x32xf32>
    %137 = arith.mulf %132, %136 : vector<8x32xf32>
    %138 = vector.broadcast %117 : vector<1x32xf32> to vector<8x32xf32>
    %139 = arith.mulf %137, %138 : vector<8x32xf32>
    %140 = vector.broadcast %119 : vector<1x32xf32> to vector<8x32xf32>
    %141 = arith.addf %139, %140 : vector<8x32xf32>
    %c0_62 = arith.constant 0 : index
    %c0_63 = arith.constant 0 : index
    %142 = vector.load %arg25[%c0_62, %c0_63] : memref<8x32xf32, #tpu.memory_space<vmem>>, vector<8x32xf32>
    tpu.vector_store %arg25[%c0_62, %c0_63], %141 {strides = array<i32>} : memref<8x32xf32, #tpu.memory_space<vmem>>, vector<8x32xf32>,
    %c1_i32 = arith.constant 1 : i32
    %143 = arith.cmpi eq, %arg1, %c1_i32 : i32
    %144 = arith.extui %143 : i1 to i32
    %c0_i32_64 = arith.constant 0 : i32
    %145 = arith.cmpi ne, %144, %c0_i32_64 : i32
    scf.if %145 {
      %c0_65 = arith.constant 0 : index
      %c0_66 = arith.constant 0 : index
      %c0_67 = arith.constant 0 : index
      %146 = vector.load %arg5[%c0_65, %c0_66, %c0_67] : memref<1x8x32xf32, #tpu.memory_space<vmem>>, vector<1x8x32xf32>
      %147 = vector.shape_cast %146 : vector<1x8x32xf32> to vector<8x32xf32>
      %148 = arith.addf %141, %147 : vector<8x32xf32>
      %149 = arith.truncf %148 : vector<8x32xf32> to vector<8x32xbf16>
      %c0_68 = arith.constant 0 : index
      %c0_69 = arith.constant 0 : index
      %150 = vector.load %arg22[%c0_68, %c0_69] : memref<32x128xbf16, #tpu.memory_space<vmem>>, vector<32x128xbf16>
      %cst_70 = arith.constant dense<0.000000e+00> : vector<8x128xf32>
      %151 = tpu.matmul %149, %150, %cst_70 {dimension_numbers = #tpu.dot_dimension_numbers<[1], [0], [0], [1], [0, 0, 1, 1], [], []>} : vector<8x32xbf16>, vector<32x128xbf16>, vector<8x128xf32> -> vector<8x128xf32>
      %c0_71 = arith.constant 0 : index
      %c0_72 = arith.constant 0 : index
      %152 = vector.load %arg23[%c0_71, %c0_72] : memref<1x128xf32, #tpu.memory_space<vmem>>, vector<1x128xf32>
      %153 = vector.broadcast %152 : vector<1x128xf32> to vector<8x128xf32>
      %154 = arith.addf %151, %153 : vector<8x128xf32>
      %c0_73 = arith.constant 0 : index
      %c0_74 = arith.constant 0 : index
      %c0_75 = arith.constant 0 : index
      %155 = vector.load %arg24[%c0_73, %c0_74, %c0_75] : memref<1x8x128xf32, #tpu.memory_space<vmem>>, vector<1x8x128xf32>
      %156 = vector.shape_cast %155 : vector<1x8x128xf32> to vector<8x128xf32>
      %157 = vector.shape_cast %154 : vector<8x128xf32> to vector<1x8x128xf32>
      tpu.vector_store %arg24[%c0_73, %c0_74, %c0_75], %157 {strides = array<i32>} : memref<1x8x128xf32, #tpu.memory_space<vmem>>, vector<1x8x128xf32>,
    } else {
    }
    return
  }
  func.func @transform_0(%arg0: i32, %arg1: i32) -> (i32, i32, i32) {
    %c0_i32 = arith.constant 0 : i32
    %c0_i32_0 = arith.constant 0 : i32
    %c0_i32_1 = arith.constant 0 : i32
    return %arg0, %c0_i32, %c0_i32_0 : i32, i32, i32
  }
  func.func @transform_1(%arg0: i32, %arg1: i32) -> (i32, i32, i32) {
    %c0_i32 = arith.constant 0 : i32
    %c0_i32_0 = arith.constant 0 : i32
    %c0_i32_1 = arith.constant 0 : i32
    return %arg0, %c0_i32, %c0_i32_0 : i32, i32, i32
  }
  func.func @transform_2(%arg0: i32, %arg1: i32) -> (i32, i32, i32) {
    %c0_i32 = arith.constant 0 : i32
    %c0_i32_0 = arith.constant 0 : i32
    %c0_i32_1 = arith.constant 0 : i32
    return %arg0, %c0_i32, %c0_i32_0 : i32, i32, i32
  }
  func.func @transform_3(%arg0: i32, %arg1: i32) -> (i32, i32, i32) {
    %c0_i32 = arith.constant 0 : i32
    %c0_i32_0 = arith.constant 0 : i32
    %c0_i32_1 = arith.constant 0 : i32
    return %arg0, %c0_i32, %c0_i32_0 : i32, i32, i32
  }
  func.func @transform_4(%arg0: i32, %arg1: i32) -> (i32, i32) {
    %c0_i32 = arith.constant 0 : i32
    %c0_i32_0 = arith.constant 0 : i32
    %c0_i32_1 = arith.constant 0 : i32
    return %c0_i32, %c0_i32_0 : i32, i32
  }
  func.func @transform_5(%arg0: i32, %arg1: i32) -> (i32, i32) {
    %c0_i32 = arith.constant 0 : i32
    %c0_i32_0 = arith.constant 0 : i32
    %c0_i32_1 = arith.constant 0 : i32
    return %c0_i32, %c0_i32_0 : i32, i32
  }
  func.func @transform_6(%arg0: i32, %arg1: i32) -> (i32, i32) {
    %c0_i32 = arith.constant 0 : i32
    %c0_i32_0 = arith.constant 0 : i32
    %c0_i32_1 = arith.constant 0 : i32
    return %c0_i32, %c0_i32_0 : i32, i32
  }
  func.func @transform_7(%arg0: i32, %arg1: i32) -> (i32, i32) {
    %c0_i32 = arith.constant 0 : i32
    %c0_i32_0 = arith.constant 0 : i32
    %c0_i32_1 = arith.constant 0 : i32
    return %c0_i32, %c0_i32_0 : i32, i32
  }
  func.func @transform_8(%arg0: i32, %arg1: i32) -> (i32, i32, i32) {
    %c0_i32 = arith.constant 0 : i32
    %c0_i32_0 = arith.constant 0 : i32
    %c0_i32_1 = arith.constant 0 : i32
    return %arg1, %c0_i32, %c0_i32_0 : i32, i32, i32
  }
  func.func @transform_9(%arg0: i32, %arg1: i32) -> (i32, i32, i32) {
    %c0_i32 = arith.constant 0 : i32
    %c0_i32_0 = arith.constant 0 : i32
    %c0_i32_1 = arith.constant 0 : i32
    return %arg1, %c0_i32, %c0_i32_0 : i32, i32, i32
  }
  func.func @transform_10(%arg0: i32, %arg1: i32) -> (i32, i32, i32) {
    %c0_i32 = arith.constant 0 : i32
    %c0_i32_0 = arith.constant 0 : i32
    %c0_i32_1 = arith.constant 0 : i32
    return %arg1, %c0_i32, %c0_i32_0 : i32, i32, i32
  }
  func.func @transform_11(%arg0: i32, %arg1: i32) -> (i32, i32, i32) {
    %c0_i32 = arith.constant 0 : i32
    %c0_i32_0 = arith.constant 0 : i32
    %c0_i32_1 = arith.constant 0 : i32
    return %arg1, %c0_i32, %c0_i32_0 : i32, i32, i32
  }
  func.func @transform_12(%arg0: i32, %arg1: i32) -> (i32, i32, i32) {
    %c0_i32 = arith.constant 0 : i32
    %c0_i32_0 = arith.constant 0 : i32
    %c0_i32_1 = arith.constant 0 : i32
    return %arg1, %c0_i32, %c0_i32_0 : i32, i32, i32
  }
  func.func @transform_13(%arg0: i32, %arg1: i32) -> (i32, i32, i32) {
    %c0_i32 = arith.constant 0 : i32
    %c0_i32_0 = arith.constant 0 : i32
    %c0_i32_1 = arith.constant 0 : i32
    return %arg1, %c0_i32, %c0_i32_0 : i32, i32, i32
  }
  func.func @transform_14(%arg0: i32, %arg1: i32) -> (i32, i32, i32) {
    %c0_i32 = arith.constant 0 : i32
    %c0_i32_0 = arith.constant 0 : i32
    %c0_i32_1 = arith.constant 0 : i32
    return %arg1, %c0_i32, %c0_i32_0 : i32, i32, i32
  }
  func.func @transform_15(%arg0: i32, %arg1: i32) -> (i32, i32, i32) {
    %c0_i32 = arith.constant 0 : i32
    %c0_i32_0 = arith.constant 0 : i32
    %c0_i32_1 = arith.constant 0 : i32
    return %arg1, %c0_i32, %c0_i32_0 : i32, i32, i32
  }
  func.func @transform_16(%arg0: i32, %arg1: i32) -> (i32, i32, i32) {
    %c0_i32 = arith.constant 0 : i32
    %c0_i32_0 = arith.constant 0 : i32
    %c0_i32_1 = arith.constant 0 : i32
    return %arg1, %c0_i32, %c0_i32_0 : i32, i32, i32
  }
  func.func @transform_17(%arg0: i32, %arg1: i32) -> (i32, i32, i32) {
    %c0_i32 = arith.constant 0 : i32
    %c0_i32_0 = arith.constant 0 : i32
    %c0_i32_1 = arith.constant 0 : i32
    return %arg1, %c0_i32, %c0_i32_0 : i32, i32, i32
  }
  func.func @transform_18(%arg0: i32, %arg1: i32) -> (i32, i32, i32) {
    %c0_i32 = arith.constant 0 : i32
    %c0_i32_0 = arith.constant 0 : i32
    %c0_i32_1 = arith.constant 0 : i32
    return %arg1, %c0_i32, %c0_i32_0 : i32, i32, i32
  }
  func.func @transform_19(%arg0: i32, %arg1: i32) -> (i32, i32, i32) {
    %c0_i32 = arith.constant 0 : i32
    %c0_i32_0 = arith.constant 0 : i32
    %c0_i32_1 = arith.constant 0 : i32
    return %arg1, %c0_i32, %c0_i32_0 : i32, i32, i32
  }
  func.func @transform_20(%arg0: i32, %arg1: i32) -> (i32, i32) {
    %c0_i32 = arith.constant 0 : i32
    %c0_i32_0 = arith.constant 0 : i32
    %c0_i32_1 = arith.constant 0 : i32
    return %c0_i32, %c0_i32_0 : i32, i32
  }
  func.func @transform_21(%arg0: i32, %arg1: i32) -> (i32, i32) {
    %c0_i32 = arith.constant 0 : i32
    %c0_i32_0 = arith.constant 0 : i32
    %c0_i32_1 = arith.constant 0 : i32
    return %c0_i32, %c0_i32_0 : i32, i32
  }
  func.func @transform_22(%arg0: i32, %arg1: i32) -> (i32, i32, i32) {
    %c0_i32 = arith.constant 0 : i32
    %c0_i32_0 = arith.constant 0 : i32
    %c0_i32_1 = arith.constant 0 : i32
    return %arg0, %c0_i32, %c0_i32_0 : i32, i32, i32
  }
}

</mosaic_0001>

<llo_original>
// kernel: _lambda_.1
$region0: #{_lambda_.1}
  #allocation0 [shape = 'u32[]', space=smem, size = 0x4, offset = 0x4, fixed_abs, tag = 'smem constant byte address 0x4 - core index']
  #allocation1 [shape = 'u32[72,128]{1,0:T(1,128)}', space=vmem, size = 0x9000, scoped, tag = 'internal scratch']
  #allocation2 [shape = 'f32[8,32]{1,0:T(8,128)}', space=vmem, size = 0x1000, scoped, tag = 'scratch operand']
  %s0 = inlined_call_operand.vmem [shape: f32[2,8,32], index: 0, kind: input, shape index: {}]
  %s1 = inlined_call_operand.vmem [shape: f32[2,8,1], index: 1, kind: input, shape index: {}]
  %s2 = inlined_call_operand.vmem [shape: f32[2,1,8], index: 2, kind: input, shape index: {}]
  %s3 = inlined_call_operand.hbm [shape: f32[2,8,32], index: 3, kind: input, shape index: {}]
  %s4 = inlined_call_operand.hbm [shape: f32[8,32], index: 4, kind: input, shape index: {}]
  %s5 = inlined_call_operand.vmem [shape: f32[2,32], index: 5, kind: input, shape index: {}]
  %s6 = inlined_call_operand.vmem [shape: f32[1,32], index: 6, kind: input, shape index: {}]
  %s7 = inlined_call_operand.vmem [shape: f32[1,32], index: 7, kind: input, shape index: {}]
  %s8 = inlined_call_operand.hbm [shape: bf16[2,32,96], index: 8, kind: input, shape index: {}]
  %s9 = inlined_call_operand.vmem [shape: f32[2,1,96], index: 9, kind: input, shape index: {}]
  %s10 = inlined_call_operand.hbm [shape: bf16[2,32,32], index: 10, kind: input, shape index: {}]
  %s11 = inlined_call_operand.vmem [shape: f32[2,1,32], index: 11, kind: input, shape index: {}, may-alias: {11,13,17,19}]
  %s12 = inlined_call_operand.vmem [shape: f32[2,1,32], index: 12, kind: input, shape index: {}, may-alias: {12,18}]
  %s13 = inlined_call_operand.vmem [shape: f32[2,1,32], index: 13, kind: input, shape index: {}, may-alias: {11,13,17,19}]
  %s14 = inlined_call_operand.vmem [shape: bf16[2,32,64], index: 14, kind: input, shape index: {}]
  %s15 = inlined_call_operand.vmem [shape: f32[2,1,64], index: 15, kind: input, shape index: {}]
  %s16 = inlined_call_operand.hbm [shape: bf16[2,64,32], index: 16, kind: input, shape index: {}]
  %s17 = inlined_call_operand.vmem [shape: f32[2,1,32], index: 17, kind: input, shape index: {}, may-alias: {11,13,17,19}]
  %s18 = inlined_call_operand.vmem [shape: f32[2,1,32], index: 18, kind: input, shape index: {}, may-alias: {12,18}]
  %s19 = inlined_call_operand.vmem [shape: f32[2,1,32], index: 19, kind: input, shape index: {}, may-alias: {11,13,17,19}]
  %s20 = inlined_call_operand.hbm [shape: bf16[32,128], index: 20, kind: input, shape index: {}]
  %s21 = inlined_call_operand.vmem [shape: f32[1,128], index: 21, kind: input, shape index: {}]
  %s22 = inlined_call_operand.hbm [shape: f32[2,8,128], index: 22, kind: output, shape index: {}]
  %s23 = sld [smem:[#allocation0]]
  $region153: #{_lambda_.1} parent=0
    _
  %s25 = ssub.s32 1, %s23
  %s26 = scalar_select 0, %s25, %s23
  $region1: #{_lambda_.1} parent=0
    #allocation3 [shape = 'u8[8192]{0}', space=vmem, size = 0x2000, scoped, tag = 'input window, operand 3']
    #allocation4 [shape = 's32[2]{0}', space=sflag, size = 0x8, scoped, tag = 'scoped memory for _lambda_.1']
    #allocation5 [shape = 's32[2]{0}', space=sflag, size = 0x8, scoped, tag = 'scoped memory for _lambda_.1']
    #allocation6 [shape = 'u8[4096]{0}', space=vmem, size = 0x1000, scoped, tag = 'input window, operand 4, single buffered']
    #allocation7 [shape = 's32[1]{0}', space=sflag, size = 0x4, scoped, tag = 'scoped memory for _lambda_.1']
    #allocation8 [shape = 'u8[16384]{0}', space=vmem, size = 0x4000, scoped, tag = 'input window, operand 8']
    #allocation9 [shape = 'u8[16384]{0}', space=vmem, size = 0x4000, scoped, tag = 'input window, operand 10']
    #allocation10 [shape = 'u8[32768]{0}', space=vmem, size = 0x8000, scoped, tag = 'input window, operand 16']
    #allocation11 [shape = 'u8[8192]{0}', space=vmem, size = 0x2000, scoped, tag = 'input window, operand 20, single buffered']
    #allocation12 [shape = 'u8[8192]{0}', space=vmem, size = 0x2000, scoped, tag = 'output window, operand 0']
    %27 = vsyncpa [#allocation4], 0
    %s28 = scalar_lea.sflag [#allocation4], 1
    %29 = vsyncpa %s28, 0
    %30 = vsyncpa [#allocation7], 0
    %31 = vsyncpa [#allocation5], 0
    %s32 = scalar_lea.sflag [#allocation5], 1
    %33 = vsyncpa %s32, 0
    loop: start=0, step=1, limit=6
    $region2: #{_lambda_.1} parent=1 // loop_pre_header
      _
    $region3: #{_lambda_.1} parent=1 // loop_header
      %s35 = sphi 0, %s39
      %p36 = scmp.ge.s32.totalorder %s35, 6
      %s42 = sphi 0, %s54
      %s43 = sphi 0, %s50
      %s44 = sphi 0, %s42
      %s45 = sphi 0, %s43
      %s46 = sphi 0, %s44
      %s47 = sphi 0, %s45
      %s57 = sphi 0, %s59
      %s60 = sphi 0, %s57
      %s61 = sphi 0, %s60
      %s77 = sphi 0, %s61
      %s83 = sphi 0, %s85
      %s86 = sphi 0, %s83
      %s87 = sphi 0, %s86
      %s103 = sphi 0, %s87
      %s109 = sphi 0, %s111
      %s112 = sphi 0, %s109
      %s113 = sphi 0, %s112
      %s129 = sphi 0, %s113
      %s135 = sphi 0, %s137
      %s138 = sphi 0, %s135
      %s139 = sphi 0, %s138
      %s155 = sphi 0, %s139
      %s159 = sphi 0, %s159
      %s161 = sphi 0, %s159
      %s162 = sphi 0, %s161
      %s176 = sphi 0, %s162
      %s180 = sphi 0, %s180
      %s182 = sphi 0, %s180
      %s183 = sphi 0, %s182
      %s197 = sphi 0, %s183
      %s201 = sphi 0, %s201
      %s203 = sphi 0, %s201
      %s204 = sphi 0, %s203
      %s218 = sphi 0, %s204
      %s222 = sphi 0, %s222
      %s224 = sphi 0, %s222
      %s225 = sphi 0, %s224
      %s239 = sphi 0, %s225
      %s245 = sphi 0, %s247
      %s248 = sphi 0, %s245
      %s249 = sphi 0, %s248
      %s265 = sphi 0, %s249
      %s271 = sphi 0, %s273
      %s274 = sphi 0, %s271
      %s275 = sphi 0, %s274
      %s291 = sphi 0, %s275
      %s297 = sphi 0, %s299
      %s300 = sphi 0, %s297
      %s301 = sphi 0, %s300
      %s317 = sphi 0, %s301
      %s323 = sphi 0, %s325
      %s326 = sphi 0, %s323
      %s327 = sphi 0, %s326
      %s343 = sphi 0, %s327
      %s349 = sphi 0, %s351
      %s352 = sphi 0, %s349
      %s353 = sphi 0, %s352
      %s369 = sphi 0, %s353
      %s375 = sphi 0, %s377
      %s378 = sphi 0, %s375
      %s379 = sphi 0, %s378
      %s395 = sphi 0, %s379
      %s401 = sphi 0, %s403
      %s404 = sphi 0, %s401
      %s405 = sphi 0, %s404
      %s421 = sphi 0, %s405
      %s427 = sphi 0, %s429
      %s430 = sphi 0, %s427
      %s431 = sphi 0, %s430
      %s447 = sphi 0, %s431
      %s453 = sphi 0, %s455
      %s456 = sphi 0, %s453
      %s457 = sphi 0, %s456
      %s473 = sphi 0, %s457
      %s479 = sphi 0, %s481
      %s482 = sphi 0, %s479
      %s483 = sphi 0, %s482
      %s499 = sphi 0, %s483
      %s505 = sphi 0, %s507
      %s508 = sphi 0, %s505
      %s509 = sphi 0, %s508
      %s525 = sphi 0, %s509
      %s531 = sphi 0, %s533
      %s534 = sphi 0, %s531
      %s535 = sphi 0, %s534
      %s551 = sphi 0, %s535
      %s555 = sphi 0, %s555
      %s557 = sphi 0, %s555
      %s558 = sphi 0, %s557
      %s572 = sphi 0, %s558
      %s576 = sphi 0, %s576
      %s578 = sphi 0, %s576
      %s579 = sphi 0, %s578
      %s593 = sphi 0, %s579
      %s599 = sphi 0, %s601
      %s602 = sphi 0, %s599
      %s603 = sphi 0, %s602
      %s619 = sphi 0, %s603
    $region4: #{_lambda_.1} parent=1 // loop_header_branch
      %38 = sbr.rel (%p36) target = $region8
    $region5: #{_lambda_.1} parent=1 // loop_body
      %s40 = ssub.s32 %s35, 1
      %s41 = ssub.s32 %s35, 2
      %s48 = sadd.s32 1, %s43
      %p49 = scmp.ge.s32.totalorder %s48, 2
      %s50 = scalar_select %p49, 0, %s48
      %s51 = sadd.s32 1, %s42
      %s52 = scalar_select %p49, %s51, %s42
      %p53 = scmp.ge.s32.totalorder %s52, 2
      %s54 = scalar_select %p53, 0, %s52
      %s55 = ssub.s32 %s42, %s54
      %p56 = scmp.eq.s32.totalorder %s55, 0
      %s58 = sadd.s32 %s57, 1
      %s59 = scalar_select %p56, %s57, %s58
      %p62 = pneg %p56
      %p63 = scmp.eq.s32.totalorder %s35, 3
      %p64 = por %p62, %p63
      %p65 = scmp.ne.s32.totalorder %s57, %s60
      %p66 = scmp.eq.s32.totalorder %s35, 0
      %p67 = por %p65, %p66
      %p68 = scmp.ne.s32.totalorder %s57, %s60
      %p69 = scmp.eq.s32.totalorder %s40, 3
      %p70 = por %p68, %p69
      %p71 = scmp.ne.s32.totalorder %s60, %s61
      %p72 = scmp.eq.s32.totalorder %s40, 0
      %p73 = por %p71, %p72
      %p74 = scmp.ne.s32.totalorder %s60, %s61
      %p75 = scmp.eq.s32.totalorder %s41, 3
      %p76 = por %p74, %p75
      %p78 = scmp.ne.s32.totalorder %s61, %s77
      %p79 = scmp.eq.s32.totalorder %s41, 0
      %p80 = por %p78, %p79
      %s81 = ssub.s32 %s42, %s54
      %p82 = scmp.eq.s32.totalorder %s81, 0
      %s84 = sadd.s32 %s83, 1
      %s85 = scalar_select %p82, %s83, %s84
      %p88 = pneg %p82
      %p89 = scmp.eq.s32.totalorder %s35, 3
      %p90 = por %p88, %p89
      %p91 = scmp.ne.s32.totalorder %s83, %s86
      %p92 = scmp.eq.s32.totalorder %s35, 0
      %p93 = por %p91, %p92
      %p94 = scmp.ne.s32.totalorder %s83, %s86
      %p95 = scmp.eq.s32.totalorder %s40, 3
      %p96 = por %p94, %p95
      %p97 = scmp.ne.s32.totalorder %s86, %s87
      %p98 = scmp.eq.s32.totalorder %s40, 0
      %p99 = por %p97, %p98
      %p100 = scmp.ne.s32.totalorder %s86, %s87
      %p101 = scmp.eq.s32.totalorder %s41, 3
      %p102 = por %p100, %p101
      %p104 = scmp.ne.s32.totalorder %s87, %s103
      %p105 = scmp.eq.s32.totalorder %s41, 0
      %p106 = por %p104, %p105
      %s107 = ssub.s32 %s42, %s54
      %p108 = scmp.eq.s32.totalorder %s107, 0
      %s110 = sadd.s32 %s109, 1
      %s111 = scalar_select %p108, %s109, %s110
      %p114 = pneg %p108
      %p115 = scmp.eq.s32.totalorder %s35, 3
      %p116 = por %p114, %p115
      %p117 = scmp.ne.s32.totalorder %s109, %s112
      %p118 = scmp.eq.s32.totalorder %s35, 0
      %p119 = por %p117, %p118
      %p120 = scmp.ne.s32.totalorder %s109, %s112
      %p121 = scmp.eq.s32.totalorder %s40, 3
      %p122 = por %p120, %p121
      %p123 = scmp.ne.s32.totalorder %s112, %s113
      %p124 = scmp.eq.s32.totalorder %s40, 0
      %p125 = por %p123, %p124
      %p126 = scmp.ne.s32.totalorder %s112, %s113
      %p127 = scmp.eq.s32.totalorder %s41, 3
      %p128 = por %p126, %p127
      %p130 = scmp.ne.s32.totalorder %s113, %s129
      %p131 = scmp.eq.s32.totalorder %s41, 0
      %p132 = por %p130, %p131
      %s133 = ssub.s32 %s42, %s54
      %p134 = scmp.eq.s32.totalorder %s133, 0
      %s136 = sadd.s32 %s135, 1
      %s137 = scalar_select %p134, %s135, %s136
      %p140 = pneg %p134
      %p141 = scmp.eq.s32.totalorder %s35, 3
      %p142 = por %p140, %p141
      %p143 = scmp.ne.s32.totalorder %s135, %s138
      %p144 = scmp.eq.s32.totalorder %s35, 0
      %p145 = por %p143, %p144
      %p146 = scmp.ne.s32.totalorder %s135, %s138
      %p147 = scmp.eq.s32.totalorder %s40, 3
      %p148 = por %p146, %p147
      %p149 = scmp.ne.s32.totalorder %s138, %s139
      %p150 = scmp.eq.s32.totalorder %s40, 0
      %p151 = por %p149, %p150
      %p152 = scmp.ne.s32.totalorder %s138, %s139
      %p153 = scmp.eq.s32.totalorder %s41, 3
      %p154 = por %p152, %p153
      %p156 = scmp.ne.s32.totalorder %s139, %s155
      %p157 = scmp.eq.s32.totalorder %s41, 0
      %p158 = por %p156, %p157
      %s160 = sadd.s32 %s159, 1
      %p163 = scmp.eq.s32.totalorder %s35, 3
      %p164 = scmp.ne.s32.totalorder %s159, %s161
      %p165 = scmp.eq.s32.totalorder %s35, 0
      %p166 = por %p164, %p165
      %p167 = scmp.ne.s32.totalorder %s159, %s161
      %p168 = scmp.eq.s32.totalorder %s40, 3
      %p169 = por %p167, %p168
      %p170 = scmp.ne.s32.totalorder %s161, %s162
      %p171 = scmp.eq.s32.totalorder %s40, 0
      %p172 = por %p170, %p171
      %p173 = scmp.ne.s32.totalorder %s161, %s162
      %p174 = scmp.eq.s32.totalorder %s41, 3
      %p175 = por %p173, %p174
      %p177 = scmp.ne.s32.totalorder %s162, %s176
      %p178 = scmp.eq.s32.totalorder %s41, 0
      %p179 = por %p177, %p178
      %s181 = sadd.s32 %s180, 1
      %p184 = scmp.eq.s32.totalorder %s35, 3
      %p185 = scmp.ne.s32.totalorder %s180, %s182
      %p186 = scmp.eq.s32.totalorder %s35, 0
      %p187 = por %p185, %p186
      %p188 = scmp.ne.s32.totalorder %s180, %s182
      %p189 = scmp.eq.s32.totalorder %s40, 3
      %p190 = por %p188, %p189
      %p191 = scmp.ne.s32.totalorder %s182, %s183
      %p192 = scmp.eq.s32.totalorder %s40, 0
      %p193 = por %p191, %p192
      %p194 = scmp.ne.s32.totalorder %s182, %s183
      %p195 = scmp.eq.s32.totalorder %s41, 3
      %p196 = por %p194, %p195
      %p198 = scmp.ne.s32.totalorder %s183, %s197
      %p199 = scmp.eq.s32.totalorder %s41, 0
      %p200 = por %p198, %p199
      %s202 = sadd.s32 %s201, 1
      %p205 = scmp.eq.s32.totalorder %s35, 3
      %p206 = scmp.ne.s32.totalorder %s201, %s203
      %p207 = scmp.eq.s32.totalorder %s35, 0
      %p208 = por %p206, %p207
      %p209 = scmp.ne.s32.totalorder %s201, %s203
      %p210 = scmp.eq.s32.totalorder %s40, 3
      %p211 = por %p209, %p210
      %p212 = scmp.ne.s32.totalorder %s203, %s204
      %p213 = scmp.eq.s32.totalorder %s40, 0
      %p214 = por %p212, %p213
      %p215 = scmp.ne.s32.totalorder %s203, %s204
      %p216 = scmp.eq.s32.totalorder %s41, 3
      %p217 = por %p215, %p216
      %p219 = scmp.ne.s32.totalorder %s204, %s218
      %p220 = scmp.eq.s32.totalorder %s41, 0
      %p221 = por %p219, %p220
      %s223 = sadd.s32 %s222, 1
      %p226 = scmp.eq.s32.totalorder %s35, 3
      %p227 = scmp.ne.s32.totalorder %s222, %s224
      %p228 = scmp.eq.s32.totalorder %s35, 0
      %p229 = por %p227, %p228
      %p230 = scmp.ne.s32.totalorder %s222, %s224
      %p231 = scmp.eq.s32.totalorder %s40, 3
      %p232 = por %p230, %p231
      %p233 = scmp.ne.s32.totalorder %s224, %s225
      %p234 = scmp.eq.s32.totalorder %s40, 0
      %p235 = por %p233, %p234
      %p236 = scmp.ne.s32.totalorder %s224, %s225
      %p237 = scmp.eq.s32.totalorder %s41, 3
      %p238 = por %p236, %p237
      %p240 = scmp.ne.s32.totalorder %s225, %s239
      %p241 = scmp.eq.s32.totalorder %s41, 0
      %p242 = por %p240, %p241
      %s243 = ssub.s32 %s43, %s50
      %p244 = scmp.eq.s32.totalorder %s243, 0
      %s246 = sadd.s32 %s245, 1
      %s247 = scalar_select %p244, %s245, %s246
      %p250 = pneg %p244
      %p251 = scmp.eq.s32.totalorder %s35, 3
      %p252 = por %p250, %p251
      %p253 = scmp.ne.s32.totalorder %s245, %s248
      %p254 = scmp.eq.s32.totalorder %s35, 0
      %p255 = por %p253, %p254
      %p256 = scmp.ne.s32.totalorder %s245, %s248
      %p257 = scmp.eq.s32.totalorder %s40, 3
      %p258 = por %p256, %p257
      %p259 = scmp.ne.s32.totalorder %s248, %s249
      %p260 = scmp.eq.s32.totalorder %s40, 0
      %p261 = por %p259, %p260
      %p262 = scmp.ne.s32.totalorder %s248, %s249
      %p263 = scmp.eq.s32.totalorder %s41, 3
      %p264 = por %p262, %p263
      %p266 = scmp.ne.s32.totalorder %s249, %s265
      %p267 = scmp.eq.s32.totalorder %s41, 0
      %p268 = por %p266, %p267
      %s269 = ssub.s32 %s43, %s50
      %p270 = scmp.eq.s32.totalorder %s269, 0
      %s272 = sadd.s32 %s271, 1
      %s273 = scalar_select %p270, %s271, %s272
      %p276 = pneg %p270
      %p277 = scmp.eq.s32.totalorder %s35, 3
      %p278 = por %p276, %p277
      %p279 = scmp.ne.s32.totalorder %s271, %s274
      %p280 = scmp.eq.s32.totalorder %s35, 0
      %p281 = por %p279, %p280
      %p282 = scmp.ne.s32.totalorder %s271, %s274
      %p283 = scmp.eq.s32.totalorder %s40, 3
      %p284 = por %p282, %p283
      %p285 = scmp.ne.s32.totalorder %s274, %s275
      %p286 = scmp.eq.s32.totalorder %s40, 0
      %p287 = por %p285, %p286
      %p288 = scmp.ne.s32.totalorder %s274, %s275
      %p289 = scmp.eq.s32.totalorder %s41, 3
      %p290 = por %p288, %p289
      %p292 = scmp.ne.s32.totalorder %s275, %s291
      %p293 = scmp.eq.s32.totalorder %s41, 0
      %p294 = por %p292, %p293
      %s295 = ssub.s32 %s43, %s50
      %p296 = scmp.eq.s32.totalorder %s295, 0
      %s298 = sadd.s32 %s297, 1
      %s299 = scalar_select %p296, %s297, %s298
      %p302 = pneg %p296
      %p303 = scmp.eq.s32.totalorder %s35, 3
      %p304 = por %p302, %p303
      %p305 = scmp.ne.s32.totalorder %s297, %s300
      %p306 = scmp.eq.s32.totalorder %s35, 0
      %p307 = por %p305, %p306
      %p308 = scmp.ne.s32.totalorder %s297, %s300
      %p309 = scmp.eq.s32.totalorder %s40, 3
      %p310 = por %p308, %p309
      %p311 = scmp.ne.s32.totalorder %s300, %s301
      %p312 = scmp.eq.s32.totalorder %s40, 0
      %p313 = por %p311, %p312
      %p314 = scmp.ne.s32.totalorder %s300, %s301
      %p315 = scmp.eq.s32.totalorder %s41, 3
      %p316 = por %p314, %p315
      %p318 = scmp.ne.s32.totalorder %s301, %s317
      %p319 = scmp.eq.s32.totalorder %s41, 0
      %p320 = por %p318, %p319
      %s321 = ssub.s32 %s43, %s50
      %p322 = scmp.eq.s32.totalorder %s321, 0
      %s324 = sadd.s32 %s323, 1
      %s325 = scalar_select %p322, %s323, %s324
      %p328 = pneg %p322
      %p329 = scmp.eq.s32.totalorder %s35, 3
      %p330 = por %p328, %p329
      %p331 = scmp.ne.s32.totalorder %s323, %s326
      %p332 = scmp.eq.s32.totalorder %s35, 0
      %p333 = por %p331, %p332
      %p334 = scmp.ne.s32.totalorder %s323, %s326
      %p335 = scmp.eq.s32.totalorder %s40, 3
      %p336 = por %p334, %p335
      %p337 = scmp.ne.s32.totalorder %s326, %s327
      %p338 = scmp.eq.s32.totalorder %s40, 0
      %p339 = por %p337, %p338
      %p340 = scmp.ne.s32.totalorder %s326, %s327
      %p341 = scmp.eq.s32.totalorder %s41, 3
      %p342 = por %p340, %p341
      %p344 = scmp.ne.s32.totalorder %s327, %s343
      %p345 = scmp.eq.s32.totalorder %s41, 0
      %p346 = por %p344, %p345
      %s347 = ssub.s32 %s43, %s50
      %p348 = scmp.eq.s32.totalorder %s347, 0
      %s350 = sadd.s32 %s349, 1
      %s351 = scalar_select %p348, %s349, %s350
      %p354 = pneg %p348
      %p355 = scmp.eq.s32.totalorder %s35, 3
      %p356 = por %p354, %p355
      %p357 = scmp.ne.s32.totalorder %s349, %s352
      %p358 = scmp.eq.s32.totalorder %s35, 0
      %p359 = por %p357, %p358
      %p360 = scmp.ne.s32.totalorder %s349, %s352
      %p361 = scmp.eq.s32.totalorder %s40, 3
      %p362 = por %p360, %p361
      %p363 = scmp.ne.s32.totalorder %s352, %s353
      %p364 = scmp.eq.s32.totalorder %s40, 0
      %p365 = por %p363, %p364
      %p366 = scmp.ne.s32.totalorder %s352, %s353
      %p367 = scmp.eq.s32.totalorder %s41, 3
      %p368 = por %p366, %p367
      %p370 = scmp.ne.s32.totalorder %s353, %s369
      %p371 = scmp.eq.s32.totalorder %s41, 0
      %p372 = por %p370, %p371
      %s373 = ssub.s32 %s43, %s50
      %p374 = scmp.eq.s32.totalorder %s373, 0
      %s376 = sadd.s32 %s375, 1
      %s377 = scalar_select %p374, %s375, %s376
      %p380 = pneg %p374
      %p381 = scmp.eq.s32.totalorder %s35, 3
      %p382 = por %p380, %p381
      %p383 = scmp.ne.s32.totalorder %s375, %s378
      %p384 = scmp.eq.s32.totalorder %s35, 0
      %p385 = por %p383, %p384
      %p386 = scmp.ne.s32.totalorder %s375, %s378
      %p387 = scmp.eq.s32.totalorder %s40, 3
      %p388 = por %p386, %p387
      %p389 = scmp.ne.s32.totalorder %s378, %s379
      %p390 = scmp.eq.s32.totalorder %s40, 0
      %p391 = por %p389, %p390
      %p392 = scmp.ne.s32.totalorder %s378, %s379
      %p393 = scmp.eq.s32.totalorder %s41, 3
      %p394 = por %p392, %p393
      %p396 = scmp.ne.s32.totalorder %s379, %s395
      %p397 = scmp.eq.s32.totalorder %s41, 0
      %p398 = por %p396, %p397
      %s399 = ssub.s32 %s43, %s50
      %p400 = scmp.eq.s32.totalorder %s399, 0
      %s402 = sadd.s32 %s401, 1
      %s403 = scalar_select %p400, %s401, %s402
      %p406 = pneg %p400
      %p407 = scmp.eq.s32.totalorder %s35, 3
      %p408 = por %p406, %p407
      %p409 = scmp.ne.s32.totalorder %s401, %s404
      %p410 = scmp.eq.s32.totalorder %s35, 0
      %p411 = por %p409, %p410
      %p412 = scmp.ne.s32.totalorder %s401, %s404
      %p413 = scmp.eq.s32.totalorder %s40, 3
      %p414 = por %p412, %p413
      %p415 = scmp.ne.s32.totalorder %s404, %s405
      %p416 = scmp.eq.s32.totalorder %s40, 0
      %p417 = por %p415, %p416
      %p418 = scmp.ne.s32.totalorder %s404, %s405
      %p419 = scmp.eq.s32.totalorder %s41, 3
      %p420 = por %p418, %p419
      %p422 = scmp.ne.s32.totalorder %s405, %s421
      %p423 = scmp.eq.s32.totalorder %s41, 0
      %p424 = por %p422, %p423
      %s425 = ssub.s32 %s43, %s50
      %p426 = scmp.eq.s32.totalorder %s425, 0
      %s428 = sadd.s32 %s427, 1
      %s429 = scalar_select %p426, %s427, %s428
      %p432 = pneg %p426
      %p433 = scmp.eq.s32.totalorder %s35, 3
      %p434 = por %p432, %p433
      %p435 = scmp.ne.s32.totalorder %s427, %s430
      %p436 = scmp.eq.s32.totalorder %s35, 0
      %p437 = por %p435, %p436
      %p438 = scmp.ne.s32.totalorder %s427, %s430
      %p439 = scmp.eq.s32.totalorder %s40, 3
      %p440 = por %p438, %p439
      %p441 = scmp.ne.s32.totalorder %s430, %s431
      %p442 = scmp.eq.s32.totalorder %s40, 0
      %p443 = por %p441, %p442
      %p444 = scmp.ne.s32.totalorder %s430, %s431
      %p445 = scmp.eq.s32.totalorder %s41, 3
      %p446 = por %p444, %p445
      %p448 = scmp.ne.s32.totalorder %s431, %s447
      %p449 = scmp.eq.s32.totalorder %s41, 0
      %p450 = por %p448, %p449
      %s451 = ssub.s32 %s43, %s50
      %p452 = scmp.eq.s32.totalorder %s451, 0
      %s454 = sadd.s32 %s453, 1
      %s455 = scalar_select %p452, %s453, %s454
      %p458 = pneg %p452
      %p459 = scmp.eq.s32.totalorder %s35, 3
      %p460 = por %p458, %p459
      %p461 = scmp.ne.s32.totalorder %s453, %s456
      %p462 = scmp.eq.s32.totalorder %s35, 0
      %p463 = por %p461, %p462
      %p464 = scmp.ne.s32.totalorder %s453, %s456
      %p465 = scmp.eq.s32.totalorder %s40, 3
      %p466 = por %p464, %p465
      %p467 = scmp.ne.s32.totalorder %s456, %s457
      %p468 = scmp.eq.s32.totalorder %s40, 0
      %p469 = por %p467, %p468
      %p470 = scmp.ne.s32.totalorder %s456, %s457
      %p471 = scmp.eq.s32.totalorder %s41, 3
      %p472 = por %p470, %p471
      %p474 = scmp.ne.s32.totalorder %s457, %s473
      %p475 = scmp.eq.s32.totalorder %s41, 0
      %p476 = por %p474, %p475
      %s477 = ssub.s32 %s43, %s50
      %p478 = scmp.eq.s32.totalorder %s477, 0
      %s480 = sadd.s32 %s479, 1
      %s481 = scalar_select %p478, %s479, %s480
      %p484 = pneg %p478
      %p485 = scmp.eq.s32.totalorder %s35, 3
      %p486 = por %p484, %p485
      %p487 = scmp.ne.s32.totalorder %s479, %s482
      %p488 = scmp.eq.s32.totalorder %s35, 0
      %p489 = por %p487, %p488
      %p490 = scmp.ne.s32.totalorder %s479, %s482
      %p491 = scmp.eq.s32.totalorder %s40, 3
      %p492 = por %p490, %p491
      %p493 = scmp.ne.s32.totalorder %s482, %s483
      %p494 = scmp.eq.s32.totalorder %s40, 0
      %p495 = por %p493, %p494
      %p496 = scmp.ne.s32.totalorder %s482, %s483
      %p497 = scmp.eq.s32.totalorder %s41, 3
      %p498 = por %p496, %p497
      %p500 = scmp.ne.s32.totalorder %s483, %s499
      %p501 = scmp.eq.s32.totalorder %s41, 0
      %p502 = por %p500, %p501
      %s503 = ssub.s32 %s43, %s50
      %p504 = scmp.eq.s32.totalorder %s503, 0
      %s506 = sadd.s32 %s505, 1
      %s507 = scalar_select %p504, %s505, %s506
      %p510 = pneg %p504
      %p511 = scmp.eq.s32.totalorder %s35, 3
      %p512 = por %p510, %p511
      %p513 = scmp.ne.s32.totalorder %s505, %s508
      %p514 = scmp.eq.s32.totalorder %s35, 0
      %p515 = por %p513, %p514
      %p516 = scmp.ne.s32.totalorder %s505, %s508
      %p517 = scmp.eq.s32.totalorder %s40, 3
      %p518 = por %p516, %p517
      %p519 = scmp.ne.s32.totalorder %s508, %s509
      %p520 = scmp.eq.s32.totalorder %s40, 0
      %p521 = por %p519, %p520
      %p522 = scmp.ne.s32.totalorder %s508, %s509
      %p523 = scmp.eq.s32.totalorder %s41, 3
      %p524 = por %p522, %p523
      %p526 = scmp.ne.s32.totalorder %s509, %s525
      %p527 = scmp.eq.s32.totalorder %s41, 0
      %p528 = por %p526, %p527
      %s529 = ssub.s32 %s43, %s50
      %p530 = scmp.eq.s32.totalorder %s529, 0
      %s532 = sadd.s32 %s531, 1
      %s533 = scalar_select %p530, %s531, %s532
      %p536 = pneg %p530
      %p537 = scmp.eq.s32.totalorder %s35, 3
      %p538 = por %p536, %p537
      %p539 = scmp.ne.s32.totalorder %s531, %s534
      %p540 = scmp.eq.s32.totalorder %s35, 0
      %p541 = por %p539, %p540
      %p542 = scmp.ne.s32.totalorder %s531, %s534
      %p543 = scmp.eq.s32.totalorder %s40, 3
      %p544 = por %p542, %p543
      %p545 = scmp.ne.s32.totalorder %s534, %s535
      %p546 = scmp.eq.s32.totalorder %s40, 0
      %p547 = por %p545, %p546
      %p548 = scmp.ne.s32.totalorder %s534, %s535
      %p549 = scmp.eq.s32.totalorder %s41, 3
      %p550 = por %p548, %p549
      %p552 = scmp.ne.s32.totalorder %s535, %s551
      %p553 = scmp.eq.s32.totalorder %s41, 0
      %p554 = por %p552, %p553
      %s556 = sadd.s32 %s555, 1
      %p559 = scmp.eq.s32.totalorder %s35, 3
      %p560 = scmp.ne.s32.totalorder %s555, %s557
      %p561 = scmp.eq.s32.totalorder %s35, 0
      %p562 = por %p560, %p561
      %p563 = scmp.ne.s32.totalorder %s555, %s557
      %p564 = scmp.eq.s32.totalorder %s40, 3
      %p565 = por %p563, %p564
      %p566 = scmp.ne.s32.totalorder %s557, %s558
      %p567 = scmp.eq.s32.totalorder %s40, 0
      %p568 = por %p566, %p567
      %p569 = scmp.ne.s32.totalorder %s557, %s558
      %p570 = scmp.eq.s32.totalorder %s41, 3
      %p571 = por %p569, %p570
      %p573 = scmp.ne.s32.totalorder %s558, %s572
      %p574 = scmp.eq.s32.totalorder %s41, 0
      %p575 = por %p573, %p574
      %s577 = sadd.s32 %s576, 1
      %p580 = scmp.eq.s32.totalorder %s35, 3
      %p581 = scmp.ne.s32.totalorder %s576, %s578
      %p582 = scmp.eq.s32.totalorder %s35, 0
      %p583 = por %p581, %p582
      %p584 = scmp.ne.s32.totalorder %s576, %s578
      %p585 = scmp.eq.s32.totalorder %s40, 3
      %p586 = por %p584, %p585
      %p587 = scmp.ne.s32.totalorder %s578, %s579
      %p588 = scmp.eq.s32.totalorder %s40, 0
      %p589 = por %p587, %p588
      %p590 = scmp.ne.s32.totalorder %s578, %s579
      %p591 = scmp.eq.s32.totalorder %s41, 3
      %p592 = por %p590, %p591
      %p594 = scmp.ne.s32.totalorder %s579, %s593
      %p595 = scmp.eq.s32.totalorder %s41, 0
      %p596 = por %p594, %p595
      %s597 = ssub.s32 %s42, %s54
      %p598 = scmp.eq.s32.totalorder %s597, 0
      %s600 = sadd.s32 %s599, 1
      %s601 = scalar_select %p598, %s599, %s600
      %p604 = pneg %p598
      %p605 = scmp.eq.s32.totalorder %s35, 3
      %p606 = por %p604, %p605
      %p607 = scmp.ne.s32.totalorder %s599, %s602
      %p608 = scmp.eq.s32.totalorder %s35, 0
      %p609 = por %p607, %p608
      %p610 = scmp.ne.s32.totalorder %s599, %s602
      %p611 = scmp.eq.s32.totalorder %s40, 3
      %p612 = por %p610, %p611
      %p613 = scmp.ne.s32.totalorder %s602, %s603
      %p614 = scmp.eq.s32.totalorder %s40, 0
      %p615 = por %p613, %p614
      %p616 = scmp.ne.s32.totalorder %s602, %s603
      %p617 = scmp.eq.s32.totalorder %s41, 3
      %p618 = por %p616, %p617
      %p620 = scmp.ne.s32.totalorder %s603, %s619
      %p621 = scmp.eq.s32.totalorder %s41, 0
      %p622 = por %p620, %p621
      %p623 = scmp.le.s32.totalorder 1, %s35
      %p624 = scmp.lt.s32.totalorder %s35, 5
      %p625 = pnand %p623, %p624
      %p626 = pneg %p625
      // Predicated region
      $region9: #{_lambda_.1} parent=5 // pred_check
        _
      $region10: #{_lambda_.1} parent=5 // pred_check_branch
        %628 = sbr.rel (%p625) target = $region12
      $region11: #{_lambda_.1} parent=5 // pred_region
        %s629 = ssub.s32 %s35, 1
        // Predicated region
        $region13: #{_lambda_.1} parent=11 // pred_check
          %p630 = pneg %p172
        $region14: #{_lambda_.1} parent=11 // pred_check_branch
          %632 = sbr.rel (%p630) target = $region16
        $region15: #{_lambda_.1} parent=11 // pred_region
          %634 = vsyncadd [#allocation7], 0
          %s636 = sshll.u32 %s4, 4
          %s637 = int_to_ptr.hbm [resolvable:$true] %s636
          %s638 = sshll.u32 [#allocation6], 4
          %s639 = int_to_ptr.vmem [resolvable:$true] %s638
          %641 = dma.hbm_to_vmem [thread:$0]  %s637, 128, %s639, [#allocation7]
        $region16: #{_lambda_.1} parent=11 // pred_fallthru
          _
        // Predicated region
        $region17: #{_lambda_.1} parent=11 // pred_check
          %p642 = pneg %p193
        $region18: #{_lambda_.1} parent=11 // pred_check_branch
          %644 = sbr.rel (%p642) target = $region20
        $region19: #{_lambda_.1} parent=11 // pred_region
          _
        $region20: #{_lambda_.1} parent=11 // pred_fallthru
          _
        // Predicated region
        $region21: #{_lambda_.1} parent=11 // pred_check
          %p645 = pneg %p214
        $region22: #{_lambda_.1} parent=11 // pred_check_branch
          %647 = sbr.rel (%p645) target = $region24
        $region23: #{_lambda_.1} parent=11 // pred_region
          _
        $region24: #{_lambda_.1} parent=11 // pred_fallthru
          _
        // Predicated region
        $region25: #{_lambda_.1} parent=11 // pred_check
          %p648 = pneg %p235
        $region26: #{_lambda_.1} parent=11 // pred_check_branch
          %650 = sbr.rel (%p648) target = $region28
        $region27: #{_lambda_.1} parent=11 // pred_region
          _
        $region28: #{_lambda_.1} parent=11 // pred_fallthru
          _
        // Predicated region
        $region29: #{_lambda_.1} parent=11 // pred_check
          %p651 = pneg %p568
        $region30: #{_lambda_.1} parent=11 // pred_check_branch
          %653 = sbr.rel (%p651) target = $region32
        $region31: #{_lambda_.1} parent=11 // pred_region
          %655 = vsyncadd [#allocation7], 0
          %s656 = sshll.u32 %s20, 4
          %s657 = int_to_ptr.hbm [resolvable:$true] %s656
          %s658 = sshll.u32 [#allocation11], 4
          %s659 = int_to_ptr.vmem [resolvable:$true] %s658
          %664 = dma.hbm_to_vmem [thread:$0]  %s657, 256, %s659, [#allocation7], 64, 64, 4
        $region32: #{_lambda_.1} parent=11 // pred_fallthru
          _
        // Predicated region
        $region33: #{_lambda_.1} parent=11 // pred_check
          %p665 = pneg %p589
        $region34: #{_lambda_.1} parent=11 // pred_check_branch
          %667 = sbr.rel (%p665) target = $region36
        $region35: #{_lambda_.1} parent=11 // pred_region
          _
        $region36: #{_lambda_.1} parent=11 // pred_fallthru
          _
      $region12: #{_lambda_.1} parent=5 // pred_fallthru
        _
      %p668 = scmp.lt.s32.totalorder %s35, 4
      // Predicated region
      $region37: #{_lambda_.1} parent=5 // pred_check
        %p669 = pneg %p668
      $region38: #{_lambda_.1} parent=5 // pred_check_branch
        %671 = sbr.rel (%p669) target = $region40
      $region39: #{_lambda_.1} parent=5 // pred_region
        // Predicated region
        $region41: #{_lambda_.1} parent=39 // pred_check
          %p672 = pneg %p67
        $region42: #{_lambda_.1} parent=39 // pred_check_branch
          %674 = sbr.rel (%p672) target = $region44
        $region43: #{_lambda_.1} parent=39 // pred_region
          %p675 = scmp.lt.s32.totalorder %s42, 1
          %s676 = scalar_select %p675, %s42, 1
          %s677 = smul.addr %s676, 8
          %s678 = scalar_lea.vmem %s0, %s677
        $region44: #{_lambda_.1} parent=39 // pred_fallthru
          _
        // Predicated region
        $region45: #{_lambda_.1} parent=39 // pred_check
          %p679 = pneg %p93
        $region46: #{_lambda_.1} parent=39 // pred_check_branch
          %681 = sbr.rel (%p679) target = $region48
        $region47: #{_lambda_.1} parent=39 // pred_region
          %p682 = scmp.lt.s32.totalorder %s42, 1
          %s683 = scalar_select %p682, %s42, 1
          %s684 = smul.addr %s683, 8
          %s685 = scalar_lea.vmem %s1, %s684
        $region48: #{_lambda_.1} parent=39 // pred_fallthru
          _
        // Predicated region
        $region49: #{_lambda_.1} parent=39 // pred_check
          %p686 = pneg %p119
        $region50: #{_lambda_.1} parent=39 // pred_check_branch
          %688 = sbr.rel (%p686) target = $region52
        $region51: #{_lambda_.1} parent=39 // pred_region
          %p689 = scmp.lt.s32.totalorder %s42, 1
          %s690 = scalar_select %p689, %s42, 1
          %s691 = scalar_lea.vmem %s2, %s690
        $region52: #{_lambda_.1} parent=39 // pred_fallthru
          _
        // Predicated region
        $region53: #{_lambda_.1} parent=39 // pred_check
          %p692 = pneg %p145
        $region54: #{_lambda_.1} parent=39 // pred_check_branch
          %694 = sbr.rel (%p692) target = $region56
        $region55: #{_lambda_.1} parent=39 // pred_region
          %s695 = sand.u32 %s35, 1
          %s696 = scalar_lea.sflag [#allocation4], %s695
          %s697 = sand.u32 %s135, 1
          %s698 = smul.addr %s697, 8
          %s699 = scalar_lea.vmem [#allocation3], %s698
          %701 = vsyncadd %s696, 0
          %s702 = smul.addr %s42, 8
          %s703 = scalar_lea.hbm %s3, %s702
          %s705 = sshll.u32 %s703, 4
          %s706 = int_to_ptr.hbm [resolvable:$true] %s705
          %s707 = sshll.u32 %s699, 4
          %s708 = int_to_ptr.vmem [resolvable:$true] %s707
          %710 = dma.hbm_to_vmem [thread:$0]  %s706, 128, %s708, %s696
        $region56: #{_lambda_.1} parent=39 // pred_fallthru
          _
        // Predicated region
        $region57: #{_lambda_.1} parent=39 // pred_check
          %p711 = pneg %p255
        $region58: #{_lambda_.1} parent=39 // pred_check_branch
          %713 = sbr.rel (%p711) target = $region60
        $region59: #{_lambda_.1} parent=39 // pred_region
          %s714 = sand.u32 %s35, 1
          %s715 = scalar_lea.sflag [#allocation4], %s714
          %s716 = sand.u32 %s245, 1
          %s717 = smul.addr %s716, 16
          %s718 = scalar_lea.vmem [#allocation8], %s717
          %720 = vsyncadd %s715, 0
          %s721 = smul.addr %s43, 4
          %s722 = smul.addr %s721, 4
          %s723 = scalar_lea.hbm %s8, %s722
          %s724 = sshll.u32 %s723, 4
          %s725 = int_to_ptr.hbm [resolvable:$true] %s724
          %s726 = sshll.u32 %s718, 4
          %s727 = int_to_ptr.vmem [resolvable:$true] %s726
          %732 = dma.hbm_to_vmem [thread:$0]  %s725, 256, %s727, %s715, 64, 64, 4
        $region60: #{_lambda_.1} parent=39 // pred_fallthru
          _
        // Predicated region
        $region61: #{_lambda_.1} parent=39 // pred_check
          %p733 = pneg %p281
        $region62: #{_lambda_.1} parent=39 // pred_check_branch
          %735 = sbr.rel (%p733) target = $region64
        $region63: #{_lambda_.1} parent=39 // pred_region
          %p736 = scmp.lt.s32.totalorder %s43, 1
          %s737 = scalar_select %p736, %s43, 1
          %s738 = scalar_lea.vmem %s9, %s737
        $region64: #{_lambda_.1} parent=39 // pred_fallthru
          _
        // Predicated region
        $region65: #{_lambda_.1} parent=39 // pred_check
          %p739 = pneg %p307
        $region66: #{_lambda_.1} parent=39 // pred_check_branch
          %741 = sbr.rel (%p739) target = $region68
        $region67: #{_lambda_.1} parent=39 // pred_region
          %s742 = sand.u32 %s35, 1
          %s743 = scalar_lea.sflag [#allocation4], %s742
          %s744 = sand.u32 %s297, 1
          %s745 = smul.addr %s744, 16
          %s746 = scalar_lea.vmem [#allocation9], %s745
          %748 = vsyncadd %s743, 0
          %s749 = smul.addr %s43, 4
          %s750 = smul.addr %s749, 4
          %s751 = scalar_lea.hbm %s10, %s750
          %s752 = sshll.u32 %s751, 4
          %s753 = int_to_ptr.hbm [resolvable:$true] %s752
          %s754 = sshll.u32 %s746, 4
          %s755 = int_to_ptr.vmem [resolvable:$true] %s754
          %760 = dma.hbm_to_vmem [thread:$0]  %s753, 256, %s755, %s743, 64, 64, 4
        $region68: #{_lambda_.1} parent=39 // pred_fallthru
          _
        // Predicated region
        $region69: #{_lambda_.1} parent=39 // pred_check
          %p761 = pneg %p333
        $region70: #{_lambda_.1} parent=39 // pred_check_branch
          %763 = sbr.rel (%p761) target = $region72
        $region71: #{_lambda_.1} parent=39 // pred_region
          %p764 = scmp.lt.s32.totalorder %s43, 1
          %s765 = scalar_select %p764, %s43, 1
          %s766 = scalar_lea.vmem %s11, %s765
        $region72: #{_lambda_.1} parent=39 // pred_fallthru
          _
        // Predicated region
        $region73: #{_lambda_.1} parent=39 // pred_check
          %p767 = pneg %p359
        $region74: #{_lambda_.1} parent=39 // pred_check_branch
          %769 = sbr.rel (%p767) target = $region76
        $region75: #{_lambda_.1} parent=39 // pred_region
          %p770 = scmp.lt.s32.totalorder %s43, 1
          %s771 = scalar_select %p770, %s43, 1
          %s772 = scalar_lea.vmem %s12, %s771
        $region76: #{_lambda_.1} parent=39 // pred_fallthru
          _
        // Predicated region
        $region77: #{_lambda_.1} parent=39 // pred_check
          %p773 = pneg %p385
        $region78: #{_lambda_.1} parent=39 // pred_check_branch
          %775 = sbr.rel (%p773) target = $region80
        $region79: #{_lambda_.1} parent=39 // pred_region
          %p776 = scmp.lt.s32.totalorder %s43, 1
          %s777 = scalar_select %p776, %s43, 1
          %s778 = scalar_lea.vmem %s13, %s777
        $region80: #{_lambda_.1} parent=39 // pred_fallthru
          _
        // Predicated region
        $region81: #{_lambda_.1} parent=39 // pred_check
          %p779 = pneg %p411
        $region82: #{_lambda_.1} parent=39 // pred_check_branch
          %781 = sbr.rel (%p779) target = $region84
        $region83: #{_lambda_.1} parent=39 // pred_region
          %p782 = scmp.lt.s32.totalorder %s43, 1
          %s783 = scalar_select %p782, %s43, 1
          %s784 = smul.addr %s783, 4
          %s785 = smul.addr %s784, 4
          %s786 = scalar_lea.vmem %s14, %s785
        $region84: #{_lambda_.1} parent=39 // pred_fallthru
          _
        // Predicated region
        $region85: #{_lambda_.1} parent=39 // pred_check
          %p787 = pneg %p437
        $region86: #{_lambda_.1} parent=39 // pred_check_branch
          %789 = sbr.rel (%p787) target = $region88
        $region87: #{_lambda_.1} parent=39 // pred_region
          %p790 = scmp.lt.s32.totalorder %s43, 1
          %s791 = scalar_select %p790, %s43, 1
          %s792 = scalar_lea.vmem %s15, %s791
        $region88: #{_lambda_.1} parent=39 // pred_fallthru
          _
        // Predicated region
        $region89: #{_lambda_.1} parent=39 // pred_check
          %p793 = pneg %p463
        $region90: #{_lambda_.1} parent=39 // pred_check_branch
          %795 = sbr.rel (%p793) target = $region92
        $region91: #{_lambda_.1} parent=39 // pred_region
          %s796 = sand.u32 %s35, 1
          %s797 = scalar_lea.sflag [#allocation4], %s796
          %s798 = sand.u32 %s453, 1
          %s799 = smul.addr %s798, 32
          %s800 = scalar_lea.vmem [#allocation10], %s799
          %802 = vsyncadd %s797, 0
          %s803 = smul.addr %s43, 8
          %s804 = smul.addr %s803, 4
          %s805 = scalar_lea.hbm %s16, %s804
          %s806 = sshll.u32 %s805, 4
          %s807 = int_to_ptr.hbm [resolvable:$true] %s806
          %s808 = sshll.u32 %s800, 4
          %s809 = int_to_ptr.vmem [resolvable:$true] %s808
          %814 = dma.hbm_to_vmem [thread:$0]  %s807, 512, %s809, %s797, 64, 64, 4
        $region92: #{_lambda_.1} parent=39 // pred_fallthru
          _
        // Predicated region
        $region93: #{_lambda_.1} parent=39 // pred_check
          %p815 = pneg %p489
        $region94: #{_lambda_.1} parent=39 // pred_check_branch
          %817 = sbr.rel (%p815) target = $region96
        $region95: #{_lambda_.1} parent=39 // pred_region
          %p818 = scmp.lt.s32.totalorder %s43, 1
          %s819 = scalar_select %p818, %s43, 1
          %s820 = scalar_lea.vmem %s17, %s819
        $region96: #{_lambda_.1} parent=39 // pred_fallthru
          _
        // Predicated region
        $region97: #{_lambda_.1} parent=39 // pred_check
          %p821 = pneg %p515
        $region98: #{_lambda_.1} parent=39 // pred_check_branch
          %823 = sbr.rel (%p821) target = $region100
        $region99: #{_lambda_.1} parent=39 // pred_region
          %p824 = scmp.lt.s32.totalorder %s43, 1
          %s825 = scalar_select %p824, %s43, 1
          %s826 = scalar_lea.vmem %s18, %s825
        $region100: #{_lambda_.1} parent=39 // pred_fallthru
          _
        // Predicated region
        $region101: #{_lambda_.1} parent=39 // pred_check
          %p827 = pneg %p541
        $region102: #{_lambda_.1} parent=39 // pred_check_branch
          %829 = sbr.rel (%p827) target = $region104
        $region103: #{_lambda_.1} parent=39 // pred_region
          %p830 = scmp.lt.s32.totalorder %s43, 1
          %s831 = scalar_select %p830, %s43, 1
          %s832 = scalar_lea.vmem %s19, %s831
        $region104: #{_lambda_.1} parent=39 // pred_fallthru
          _
      $region40: #{_lambda_.1} parent=5 // pred_fallthru
        _
      %p833 = scmp.le.s32.totalorder 1, %s35
      %p834 = scmp.lt.s32.totalorder %s35, 5
      %p835 = pnand %p833, %p834
      %p836 = pneg %p835
      // Predicated region
      $region105: #{_lambda_.1} parent=5 // pred_check
        _
      $region106: #{_lambda_.1} parent=5 // pred_check_branch
        %838 = sbr.rel (%p835) target = $region108
      $region107: #{_lambda_.1} parent=5 // pred_region
        %s839 = ssub.s32 %s35, 1
        %s840 = sand.u32 %s40, 1
        %s841 = scalar_lea.sflag [#allocation4], %s840
        %s842 = sand.u32 %s138, 1
        %s843 = smul.addr %s842, 8
        %s844 = scalar_lea.vmem [#allocation3], %s843
        // Predicated region
        $region109: #{_lambda_.1} parent=107 // pred_check
          %p845 = pneg %p151
        $region110: #{_lambda_.1} parent=107 // pred_check_branch
          %847 = sbr.rel (%p845) target = $region112
        $region111: #{_lambda_.1} parent=107 // pred_region
          %849 = dma.done %s841, 128
        $region112: #{_lambda_.1} parent=107 // pred_fallthru
          _
        // Predicated region
        $region113: #{_lambda_.1} parent=107 // pred_check
          %p850 = pneg %p172
        $region114: #{_lambda_.1} parent=107 // pred_check_branch
          %852 = sbr.rel (%p850) target = $region116
        $region115: #{_lambda_.1} parent=107 // pred_region
          %854 = dma.done [#allocation7], 128
        $region116: #{_lambda_.1} parent=107 // pred_fallthru
          _
        %s855 = sand.u32 %s40, 1
        %s856 = scalar_lea.sflag [#allocation4], %s855
        %s857 = sand.u32 %s248, 1
        %s858 = smul.addr %s857, 16
        %s859 = scalar_lea.vmem [#allocation8], %s858
        // Predicated region
        $region117: #{_lambda_.1} parent=107 // pred_check
          %p860 = pneg %p261
        $region118: #{_lambda_.1} parent=107 // pred_check_branch
          %862 = sbr.rel (%p860) target = $region120
        $region119: #{_lambda_.1} parent=107 // pred_region
          %864 = dma.done %s856, 256
        $region120: #{_lambda_.1} parent=107 // pred_fallthru
          _
        %s865 = sand.u32 %s40, 1
        %s866 = scalar_lea.sflag [#allocation4], %s865
        %s867 = sand.u32 %s300, 1
        %s868 = smul.addr %s867, 16
        %s869 = scalar_lea.vmem [#allocation9], %s868
        // Predicated region
        $region121: #{_lambda_.1} parent=107 // pred_check
          %p870 = pneg %p313
        $region122: #{_lambda_.1} parent=107 // pred_check_branch
          %872 = sbr.rel (%p870) target = $region124
        $region123: #{_lambda_.1} parent=107 // pred_region
          %874 = dma.done %s866, 256
        $region124: #{_lambda_.1} parent=107 // pred_fallthru
          _
        %s875 = sand.u32 %s40, 1
        %s876 = scalar_lea.sflag [#allocation4], %s875
        %s877 = sand.u32 %s456, 1
        %s878 = smul.addr %s877, 32
        %s879 = scalar_lea.vmem [#allocation10], %s878
        // Predicated region
        $region125: #{_lambda_.1} parent=107 // pred_check
          %p880 = pneg %p469
        $region126: #{_lambda_.1} parent=107 // pred_check_branch
          %882 = sbr.rel (%p880) target = $region128
        $region127: #{_lambda_.1} parent=107 // pred_region
          %884 = dma.done %s876, 512
        $region128: #{_lambda_.1} parent=107 // pred_fallthru
          _
        // Predicated region
        $region129: #{_lambda_.1} parent=107 // pred_check
          %p885 = pneg %p568
        $region130: #{_lambda_.1} parent=107 // pred_check_branch
          %887 = sbr.rel (%p885) target = $region132
        $region131: #{_lambda_.1} parent=107 // pred_region
          %889 = dma.done [#allocation7], 256
        $region132: #{_lambda_.1} parent=107 // pred_fallthru
          _
        %p890 = scmp.lt.s32.totalorder %s44, 1
        %s891 = scalar_select %p890, %s44, 1
        %s892 = smul.addr %s891, 8
        %s893 = scalar_lea.vmem %s0, %s892
        %p894 = pneg %p73
        %p895 = pneg %p70
        %p896 = scmp.lt.s32.totalorder %s44, 1
        %s897 = scalar_select %p896, %s44, 1
        %s898 = smul.addr %s897, 8
        %s899 = scalar_lea.vmem %s1, %s898
        %p900 = pneg %p99
        %p901 = pneg %p96
        %p902 = scmp.lt.s32.totalorder %s44, 1
        %s903 = scalar_select %p902, %s44, 1
        %s904 = scalar_lea.vmem %s2, %s903
        %p905 = pneg %p125
        %p906 = pneg %p122
        %s907 = sand.u32 %s40, 1
        %s908 = scalar_lea.sflag [#allocation4], %s907
        %s909 = sand.u32 %s138, 1
        %s910 = smul.addr %s909, 8
        %s911 = scalar_lea.vmem [#allocation3], %s910
        %p912 = pneg %p151
        %p913 = pneg %p148
        %p914 = pneg %p172
        %p915 = pneg %p169
        %p916 = pneg %p193
        %p917 = pneg %p190
        %p918 = pneg %p214
        %p919 = pneg %p211
        %p920 = pneg %p235
        %p921 = pneg %p232
        %s922 = sand.u32 %s40, 1
        %s923 = scalar_lea.sflag [#allocation4], %s922
        %s924 = sand.u32 %s248, 1
        %s925 = smul.addr %s924, 16
        %s926 = scalar_lea.vmem [#allocation8], %s925
        %p927 = pneg %p261
        %p928 = pneg %p258
        %p929 = scmp.lt.s32.totalorder %s45, 1
        %s930 = scalar_select %p929, %s45, 1
        %s931 = scalar_lea.vmem %s9, %s930
        %p932 = pneg %p287
        %p933 = pneg %p284
        %s934 = sand.u32 %s40, 1
        %s935 = scalar_lea.sflag [#allocation4], %s934
        %s936 = sand.u32 %s300, 1
        %s937 = smul.addr %s936, 16
        %s938 = scalar_lea.vmem [#allocation9], %s937
        %p939 = pneg %p313
        %p940 = pneg %p310
        %p941 = scmp.lt.s32.totalorder %s45, 1
        %s942 = scalar_select %p941, %s45, 1
        %s943 = scalar_lea.vmem %s11, %s942
        %p944 = pneg %p339
        %p945 = pneg %p336
        %p946 = scmp.lt.s32.totalorder %s45, 1
        %s947 = scalar_select %p946, %s45, 1
        %s948 = scalar_lea.vmem %s12, %s947
        %p949 = pneg %p365
        %p950 = pneg %p362
        %p951 = scmp.lt.s32.totalorder %s45, 1
        %s952 = scalar_select %p951, %s45, 1
        %s953 = scalar_lea.vmem %s13, %s952
        %p954 = pneg %p391
        %p955 = pneg %p388
        %p956 = scmp.lt.s32.totalorder %s45, 1
        %s957 = scalar_select %p956, %s45, 1
        %s958 = smul.addr %s957, 4
        %s959 = smul.addr %s958, 4
        %s960 = scalar_lea.vmem %s14, %s959
        %p961 = pneg %p417
        %p962 = pneg %p414
        %p963 = scmp.lt.s32.totalorder %s45, 1
        %s964 = scalar_select %p963, %s45, 1
        %s965 = scalar_lea.vmem %s15, %s964
        %p966 = pneg %p443
        %p967 = pneg %p440
        %s968 = sand.u32 %s40, 1
        %s969 = scalar_lea.sflag [#allocation4], %s968
        %s970 = sand.u32 %s456, 1
        %s971 = smul.addr %s970, 32
        %s972 = scalar_lea.vmem [#allocation10], %s971
        %p973 = pneg %p469
        %p974 = pneg %p466
        %p975 = scmp.lt.s32.totalorder %s45, 1
        %s976 = scalar_select %p975, %s45, 1
        %s977 = scalar_lea.vmem %s17, %s976
        %p978 = pneg %p495
        %p979 = pneg %p492
        %p980 = scmp.lt.s32.totalorder %s45, 1
        %s981 = scalar_select %p980, %s45, 1
        %s982 = scalar_lea.vmem %s18, %s981
        %p983 = pneg %p521
        %p984 = pneg %p518
        %p985 = scmp.lt.s32.totalorder %s45, 1
        %s986 = scalar_select %p985, %s45, 1
        %s987 = scalar_lea.vmem %s19, %s986
        %p988 = pneg %p547
        %p989 = pneg %p544
        %p990 = pneg %p568
        %p991 = pneg %p565
        %p992 = pneg %p589
        %p993 = pneg %p586
        %p994 = pneg %p615
        %p995 = pneg %p612
        %s996 = sand.u32 %s602, 1
        %s997 = scalar_lea.sflag [#allocation5], %s996
        %s998 = sand.u32 %s602, 1
        %s999 = smul.addr %s998, 8
        %s1000 = scalar_lea.vmem [#allocation12], %s999
        %p1001 = scmp.lt.s32.totalorder %s44, 1
        %s1002 = scalar_select %p1001, %s44, 1
        %s1003 = smul.addr %s1002, 8
        %s1004 = scalar_lea.vmem %s0, %s1003
        %p1005 = scmp.lt.s32.totalorder %s44, 1
        %s1006 = scalar_select %p1005, %s44, 1
        %s1007 = smul.addr %s1006, 8
        %s1008 = scalar_lea.vmem %s1, %s1007
        %p1009 = scmp.lt.s32.totalorder %s44, 1
        %s1010 = scalar_select %p1009, %s44, 1
        %s1011 = scalar_lea.vmem %s2, %s1010
        %p1012 = scmp.lt.s32.totalorder %s45, 1
        %s1013 = scalar_select %p1012, %s45, 1
        %s1014 = scalar_lea.vmem %s9, %s1013
        %p1015 = scmp.lt.s32.totalorder %s45, 1
        %s1016 = scalar_select %p1015, %s45, 1
        %s1017 = scalar_lea.vmem %s11, %s1016
        %p1018 = scmp.lt.s32.totalorder %s45, 1
        %s1019 = scalar_select %p1018, %s45, 1
        %s1020 = scalar_lea.vmem %s12, %s1019
        %p1021 = scmp.lt.s32.totalorder %s45, 1
        %s1022 = scalar_select %p1021, %s45, 1
        %s1023 = scalar_lea.vmem %s13, %s1022
        %p1024 = scmp.lt.s32.totalorder %s45, 1
        %s1025 = scalar_select %p1024, %s45, 1
        %s1026 = smul.addr %s1025, 4
        %s1027 = smul.addr %s1026, 4
        %s1028 = scalar_lea.vmem %s14, %s1027
        %p1029 = scmp.lt.s32.totalorder %s45, 1
        %s1030 = scalar_select %p1029, %s45, 1
        %s1031 = scalar_lea.vmem %s15, %s1030
        %p1032 = scmp.lt.s32.totalorder %s45, 1
        %s1033 = scalar_select %p1032, %s45, 1
        %s1034 = scalar_lea.vmem %s17, %s1033
        %p1035 = scmp.lt.s32.totalorder %s45, 1
        %s1036 = scalar_select %p1035, %s45, 1
        %s1037 = scalar_lea.vmem %s18, %s1036
        %p1038 = scmp.lt.s32.totalorder %s45, 1
        %s1039 = scalar_select %p1038, %s45, 1
        %s1040 = scalar_lea.vmem %s19, %s1039
        %p1042 = scmp.eq.s32.totalorder %s45, 0
        // Predicated region
        $region133: #{_lambda_.1} parent=107 // pred_check
          %p1043 = pneg %p1042
        $region134: #{_lambda_.1} parent=107 // pred_check_branch
          %1045 = sbr.rel (%p1043) target = $region136
        $region135: #{_lambda_.1} parent=107 // pred_region
          %v1046 = vld [vmem:[%s1008] sm:$0xff]
          %vm1047 = vcmp.eq.f32.partialorder %v1046, 0.0
          %v1048 = vld [vmem:[%s5] sm:$0x1]
          %v1049 = vld [vmem:[%s5 + $0x1] sm:$0x1]
          %v1050 = vsel %vm1047, 1, 0
          %1051 = vset.pattern.permute.xlu0 0
          %1052 = vperm.xlu0 %1051, %v1050
          %v1053 = vpop.permute.xlu0 %1052
          %vm1054 = vcmp.eq.s32.totalorder %v1053, 1
          %v1055 = vperm.slane %v1048, 0
          %v1056 = vperm.slane %v1049, 0
          %v1057 = vsel %vm1054, %v1055, %v1056
          %v1058 = vld [vmem:[%s1004] sm:$0xff]
          %v1059 = vadd.f32 %v1058, %v1057
          %v1060 = vld [vmem:[#allocation6] sm:$0xff]
          %v1061 = vadd.f32 %v1059, %v1060
          %v1062 = vld [vmem:[%s6] sm:$0x1]
          %v1063 = vld [vmem:[%s7] sm:$0x1]
          %vm1064 = vcmask 261120
          %v1065 = vsel %vm1064, %v1061, 0.0
          %1066 = vadd.xlane.f32.xlu0 %v1065
          %v1067 = vpop.xlane.xlu0 %1066
          %v1068 = vrcp.pop 32.0
          %v1069 = vmul.f32 32.0, %v1068
          %v1070 = vsub.f32 1.0, %v1069
          %v1071 = vmul.f32 %v1068, %v1070
          %v1072 = vadd.f32 %v1068, %v1071
          %vm1073 = vweird.f32 %v1068
          %v1074 = vsel %vm1073, %v1068, %v1072
          %v1075 = vmul.f32 %v1067, %v1074
          %v1076 = vsub.f32 %v1061, %v1075
          %v1077 = vmul.f32 %v1076, %v1076
          %v1078 = vsel %vm1064, %v1077, 0.0
          %1079 = vadd.xlane.f32.xlu0 %v1078
          %v1080 = vpop.xlane.xlu0 %1079
          %v1081 = vmul.f32 %v1080, %v1074
          %v1082 = vadd.f32 %v1081, 1e-12
          %v1083 = vrsqrt.pop %v1082
          %v1084 = vmul.f32 %v1083, %v1082
          %v1085 = vmul.f32 %v1084, %v1083
          %v1086 = vmul.f32 0.5, %v1085
          %v1087 = vsub.f32 1.5, %v1086
          %v1088 = vmul.f32 %v1083, %v1087
          %vm1089 = vweird.f32 %v1082
          %vm1090 = vweird.f32 %v1083
          %vm1091 = vmor %vm1089, %vm1090
          %v1092 = vsel %vm1091, %v1083, %v1088
          %v1093 = vmul.f32 %v1076, %v1092
          %v1095 = vperm.slane %v1062, 0
          %v1097 = vmul.f32 %v1093, %v1095
          %v1099 = vperm.slane %v1063, 0
          %v1101 = vadd.f32 %v1097, %v1099
          %1102 = vst.msk [vmem:[#allocation2] sm:$0xff] %vm1064, %v1101
        $region136: #{_lambda_.1} parent=107 // pred_fallthru
          _
        %v1103 = vld [vmem:[#allocation2] sm:$0xff]
        %v1104 = vld [vmem:[%s1011] sm:$0x1]
        %v1105 = vpack.c.bf16 %v1103, %v1103
        %v1106 = vld [vmem:[%s859] sm:$0xf]
        %v1107 = vld [vmem:[%s859 + $0x4] sm:$0xf]
        %v1108 = vld [vmem:[%s859 + $0x8] sm:$0xf]
        %v1109 = vld [vmem:[%s859 + $0xc] sm:$0xf]
        %v1110 = vld [vmem:[%s1014] sm:$0x1]
        %v1112 = vperm.slane %v1110, 0
        %v1118 = vunpack.c.l.b16 %v1106
        %v1119 = vunpack.c.l.b16 %v1107
        %v1120 = vunpack.c.l.b16 %v1108
        %v1121 = vunpack.c.l.b16 %v1109
        %v1122 = vpack.c.b16 %v1119, %v1118
        %v1123 = vpack.c.b16 %v1121, %v1120
        %vm1126 = vcmask 261120
        %v1128 = vsel %vm1126, %v1105, 0
        %1130 = vmatpush.bf16.msra.mxu0 0
        %1131 = vmatpush.bf16.msra.mxu0 0
        %1132 = vmatpush.bf16.msra.mxu0 0
        %1133 = vmatpush.bf16.msra.mxu0 0
        %1134 = vmatpush.bf16.msra.mxu0 0
        %1135 = vmatpush.bf16.msra.mxu0 0
        %1136 = vmatpush.bf16.msra.mxu0 %v1123
        %1137 = vmatpush.bf16.msra.mxu0 %v1122
        %1138 = vmatmul.bf16.gmra.mxu0 %v1128
        %v1139 = vpop.f32.mrf.mxu0
        %v1140 = vadd.f32 %v1112, %v1139
        %v1141 = vpop.f32.mrf.mxu0
        %1142 = vdwg.mxu0
        %v1143 = vpack.c.bf16 %v1140, %v1140
        %1145 = vrot.lane.b32.xlu0 %v1143, 112
        %v1146 = vpop.permute.xlu0 %1145
        %v1148 = vperm.slane %v1104, 0
        %v1150 = vunpack.c.l.b16 %v1143
        %v1151 = vpack.c.b16 %v1150, %v1150
        %1152 = vrot.lane.b32.xlu0 %v1151, 96
        %v1153 = vpop.permute.xlu0 %1152
        %vm1154 = vcmask 130048
        %v1156 = vsel %vm1154, %v1143, 0
        %v1159 = vsel %vm1154, %v1153, 0
        %1161 = vmatpush.bf16.xpose.msra.mxu0 0
        %1162 = vmatpush.bf16.xpose.msra.mxu0 0
        %1163 = vmatpush.bf16.xpose.msra.mxu0 0
        %1164 = vmatpush.bf16.xpose.msra.mxu0 0
        %1165 = vmatpush.bf16.xpose.msra.mxu0 0
        %1166 = vmatpush.bf16.xpose.msra.mxu0 0
        %1167 = vmatpush.bf16.xpose.msra.mxu0 0
        %1168 = vmatpush.bf16.xpose.msra.mxu0 %v1159
        %1169 = vmatmul.bf16.gmra.mxu0 %v1156
        %v1170 = vpop.f32.mrf.mxu0
        %v1171 = vadd.f32 %v1148, %v1170
        %v1172 = vpop.f32.mrf.mxu0
        %1173 = vdwg.mxu0
        %v1174 = vunpack.c.l.b16 %v1146
        %v1175 = vpack.c.b16 %v1174, %v1174
        %1176 = vrot.lane.b32.xlu0 %v1175, 96
        %v1177 = vpop.permute.xlu0 %1176
        %v1179 = vsel %vm1154, %v1146, 0
        %v1182 = vsel %vm1154, %v1177, 0
        %1184 = vmatpush.bf16.xpose.msra.mxu0 0
        %1185 = vmatpush.bf16.xpose.msra.mxu0 0
        %1186 = vmatpush.bf16.xpose.msra.mxu0 0
        %1187 = vmatpush.bf16.xpose.msra.mxu0 0
        %1188 = vmatpush.bf16.xpose.msra.mxu0 0
        %1189 = vmatpush.bf16.xpose.msra.mxu0 0
        %1190 = vmatpush.bf16.xpose.msra.mxu0 0
        %1191 = vmatpush.bf16.xpose.msra.mxu0 %v1182
        %1192 = vmatmul.bf16.gmra.mxu0 %v1179
        %v1193 = vpop.f32.mrf.mxu0
        %v1194 = vadd.f32 %v1148, %v1193
        %v1195 = vpop.f32.mrf.mxu0
        %1196 = vdwg.mxu0
        %vm1197 = vcmask 64512
        %v1198 = vsel %vm1197, %v1171, -inf
        %1199 = vmax.xlane.f32.xlu0 %v1198
        %v1200 = vpop.xlane.xlu0 %1199
        %v1201 = vsel %vm1197, %v1194, -inf
        %1202 = vmax.xlane.f32.xlu0 %v1201
        %v1203 = vpop.xlane.xlu0 %1202
        %v1204 = vsub.f32 %v1171, %v1200
        %v1205 = vsub.f32 %v1194, %v1203
        %v1206 = vmul.f32 %v1204, 1.442695
        %v1207 = vpow.pop %v1206
        %v1208 = vmul.f32 %v1205, 1.442695
        %v1209 = vpow.pop %v1208
        %v1210 = vsel %vm1197, %v1207, 0.0
        %1211 = vadd.xlane.f32.xlu0 %v1210
        %v1212 = vpop.xlane.xlu0 %1211
        %v1213 = vsel %vm1197, %v1209, 0.0
        %1214 = vadd.xlane.f32.xlu0 %v1213
        %v1215 = vpop.xlane.xlu0 %1214
        %v1216 = vrcp.pop %v1212
        %v1217 = vrcp.pop %v1215
        %v1218 = vmul.f32 %v1207, %v1216
        %v1219 = vmul.f32 %v1209, %v1217
        %v1220 = vpack.c.bf16 %v1218, %v1218
        %v1221 = vpack.c.bf16 %v1219, %v1219
        %1222 = vrot.lane.b32.xlu0 %v1151, 64
        %v1223 = vpop.permute.xlu0 %1222
        %v1225 = vsel %vm1197, %v1220, 0
        %vm1227 = vcmask 1043456
        %v1229 = vsel %vm1227, %v1223, 0
        %1231 = vmatpush.bf16.msra.mxu0 0
        %1232 = vmatpush.bf16.msra.mxu0 0
        %1233 = vmatpush.bf16.msra.mxu0 0
        %1234 = vmatpush.bf16.msra.mxu0 0
        %1235 = vmatpush.bf16.msra.mxu0 0
        %1236 = vmatpush.bf16.msra.mxu0 0
        %1237 = vmatpush.bf16.msra.mxu0 0
        %1238 = vmatpush.bf16.msra.mxu0 %v1229
        %1239 = vmatmul.bf16.gmra.mxu0 %v1225
        %v1240 = vpop.f32.mrf.mxu0
        %v1241 = vadd.f32 0.0, %v1240
        %v1242 = vpop.f32.mrf.mxu0
        %1243 = vdwg.mxu0
        %1244 = vrot.lane.b32.xlu0 %v1175, 64
        %v1245 = vpop.permute.xlu0 %1244
        %v1247 = vsel %vm1197, %v1221, 0
        %v1250 = vsel %vm1227, %v1245, 0
        %1252 = vmatpush.bf16.msra.mxu0 0
        %1253 = vmatpush.bf16.msra.mxu0 0
        %1254 = vmatpush.bf16.msra.mxu0 0
        %1255 = vmatpush.bf16.msra.mxu0 0
        %1256 = vmatpush.bf16.msra.mxu0 0
        %1257 = vmatpush.bf16.msra.mxu0 0
        %1258 = vmatpush.bf16.msra.mxu0 0
        %1259 = vmatpush.bf16.msra.mxu0 %v1250
        %1260 = vmatmul.bf16.gmra.mxu0 %v1247
        %v1261 = vpop.f32.mrf.mxu0
        %v1262 = vadd.f32 0.0, %v1261
        %v1263 = vpop.f32.mrf.mxu0
        %1264 = vdwg.mxu0
        %1266 = vrot.lane.b32.xlu0 %v1262, 16
        %v1267 = vpop.permute.xlu0 %1266
        %v1269 = vsel %vm1154, %v1241, %v1267
        %v1270 = vpack.c.bf16 %v1269, %v1269
        %v1271 = vld [vmem:[%s869] sm:$0xf]
        %v1272 = vld [vmem:[%s869 + $0x4] sm:$0xf]
        %v1273 = vld [vmem:[%s869 + $0x8] sm:$0xf]
        %v1274 = vld [vmem:[%s869 + $0xc] sm:$0xf]
        %v1275 = vld [vmem:[%s1017] sm:$0x1]
        %v1277 = vperm.slane %v1275, 0
        %v1283 = vunpack.c.l.b16 %v1271
        %v1284 = vunpack.c.l.b16 %v1272
        %v1285 = vunpack.c.l.b16 %v1273
        %v1286 = vunpack.c.l.b16 %v1274
        %v1287 = vpack.c.b16 %v1284, %v1283
        %v1288 = vpack.c.b16 %v1286, %v1285
        %v1292 = vsel %vm1126, %v1270, 0
        %1294 = vmatpush.bf16.msra.mxu0 0
        %1295 = vmatpush.bf16.msra.mxu0 0
        %1296 = vmatpush.bf16.msra.mxu0 0
        %1297 = vmatpush.bf16.msra.mxu0 0
        %1298 = vmatpush.bf16.msra.mxu0 0
        %1299 = vmatpush.bf16.msra.mxu0 0
        %1300 = vmatpush.bf16.msra.mxu0 %v1288
        %1301 = vmatpush.bf16.msra.mxu0 %v1287
        %1302 = vmatmul.bf16.gmra.mxu0 %v1292
        %v1303 = vpop.f32.mrf.mxu0
        %v1304 = vadd.f32 %v1277, %v1303
        %v1305 = vpop.f32.mrf.mxu0
        %1306 = vdwg.mxu0
        %v1307 = vadd.f32 %v1304, %v1103
        %v1308 = vld [vmem:[%s1020] sm:$0x1]
        %v1309 = vld [vmem:[%s1023] sm:$0x1]
        %v1310 = vsel %vm1126, %v1307, 0.0
        %1311 = vadd.xlane.f32.xlu0 %v1310
        %v1312 = vpop.xlane.xlu0 %1311
        %v1313 = vrcp.pop 32.0
        %v1314 = vmul.f32 32.0, %v1313
        %v1315 = vsub.f32 1.0, %v1314
        %v1316 = vmul.f32 %v1313, %v1315
        %v1317 = vadd.f32 %v1313, %v1316
        %vm1318 = vweird.f32 %v1313
        %v1319 = vsel %vm1318, %v1313, %v1317
        %v1320 = vmul.f32 %v1312, %v1319
        %v1321 = vsub.f32 %v1307, %v1320
        %v1322 = vmul.f32 %v1321, %v1321
        %v1323 = vsel %vm1126, %v1322, 0.0
        %1324 = vadd.xlane.f32.xlu0 %v1323
        %v1325 = vpop.xlane.xlu0 %1324
        %v1326 = vmul.f32 %v1325, %v1319
        %v1327 = vadd.f32 %v1326, 1e-12
        %v1328 = vrsqrt.pop %v1327
        %v1329 = vmul.f32 %v1328, %v1327
        %v1330 = vmul.f32 %v1329, %v1328
        %v1331 = vmul.f32 0.5, %v1330
        %v1332 = vsub.f32 1.5, %v1331
        %v1333 = vmul.f32 %v1328, %v1332
        %vm1334 = vweird.f32 %v1327
        %vm1335 = vweird.f32 %v1328
        %vm1336 = vmor %vm1334, %vm1335
        %v1337 = vsel %vm1336, %v1328, %v1333
        %v1338 = vmul.f32 %v1321, %v1337
        %v1340 = vperm.slane %v1308, 0
        %v1342 = vmul.f32 %v1338, %v1340
        %v1344 = vperm.slane %v1309, 0
        %v1346 = vadd.f32 %v1342, %v1344
        %v1347 = vpack.c.bf16 %v1346, %v1346
        %v1348 = vld [vmem:[%s1028] sm:$0xf]
        %v1349 = vld [vmem:[%s1028 + $0x4] sm:$0xf]
        %v1350 = vld [vmem:[%s1028 + $0x8] sm:$0xf]
        %v1351 = vld [vmem:[%s1028 + $0xc] sm:$0xf]
        %v1352 = vld [vmem:[%s1031] sm:$0x1]
        %v1354 = vperm.slane %v1352, 0
        %v1360 = vunpack.c.l.b16 %v1348
        %v1361 = vunpack.c.l.b16 %v1349
        %v1362 = vunpack.c.l.b16 %v1350
        %v1363 = vunpack.c.l.b16 %v1351
        %v1364 = vpack.c.b16 %v1361, %v1360
        %v1365 = vpack.c.b16 %v1363, %v1362
        %v1369 = vsel %vm1126, %v1347, 0
        %1371 = vmatpush.bf16.msra.mxu0 0
        %1372 = vmatpush.bf16.msra.mxu0 0
        %1373 = vmatpush.bf16.msra.mxu0 0
        %1374 = vmatpush.bf16.msra.mxu0 0
        %1375 = vmatpush.bf16.msra.mxu0 0
        %1376 = vmatpush.bf16.msra.mxu0 0
        %1377 = vmatpush.bf16.msra.mxu0 %v1365
        %1378 = vmatpush.bf16.msra.mxu0 %v1364
        %1379 = vmatmul.bf16.gmra.mxu0 %v1369
        %v1380 = vpop.f32.mrf.mxu0
        %v1381 = vadd.f32 %v1354, %v1380
        %v1382 = vpop.f32.mrf.mxu0
        %1383 = vdwg.mxu0
        %v1384 = vmul.f32 %v1381, %v1381
        %v1385 = vmul.f32 %v1381, %v1384
        %v1386 = vmul.f32 %v1385, 0.044715
        %v1387 = vadd.f32 %v1381, %v1386
        %v1388 = vmul.f32 %v1387, 0.7978846
        %v1389 = vtanh.pop %v1388
        %v1390 = vadd.f32 %v1389, 1.0
        %v1391 = vmul.f32 %v1390, 0.5
        %v1392 = vmul.f32 %v1381, %v1391
        %v1393 = vpack.c.bf16 %v1392, %v1392
        %v1394 = vld [vmem:[%s879] sm:$0xf]
        %v1395 = vld [vmem:[%s879 + $0x4] sm:$0xf]
        %v1396 = vld [vmem:[%s879 + $0x8] sm:$0xf]
        %v1397 = vld [vmem:[%s879 + $0xc] sm:$0xf]
        %v1398 = vld [vmem:[%s879 + $0x10] sm:$0xf]
        %v1399 = vld [vmem:[%s879 + $0x14] sm:$0xf]
        %v1400 = vld [vmem:[%s879 + $0x18] sm:$0xf]
        %v1401 = vld [vmem:[%s879 + $0x1c] sm:$0xf]
        %v1402 = vld [vmem:[%s1034] sm:$0x1]
        %v1404 = vperm.slane %v1402, 0
        %v1414 = vunpack.c.l.b16 %v1394
        %v1415 = vunpack.c.l.b16 %v1395
        %v1416 = vunpack.c.l.b16 %v1396
        %v1417 = vunpack.c.l.b16 %v1397
        %v1418 = vunpack.c.l.b16 %v1398
        %v1419 = vunpack.c.l.b16 %v1399
        %v1420 = vunpack.c.l.b16 %v1400
        %v1421 = vunpack.c.l.b16 %v1401
        %v1422 = vpack.c.b16 %v1415, %v1414
        %v1423 = vpack.c.b16 %v1417, %v1416
        %v1424 = vpack.c.b16 %v1419, %v1418
        %v1425 = vpack.c.b16 %v1421, %v1420
        %vm1430 = vcmask 523264
        %v1432 = vsel %vm1430, %v1393, 0
        %1434 = vmatpush.bf16.msra.mxu0 0
        %1435 = vmatpush.bf16.msra.mxu0 0
        %1436 = vmatpush.bf16.msra.mxu0 0
        %1437 = vmatpush.bf16.msra.mxu0 0
        %1438 = vmatpush.bf16.msra.mxu0 %v1425
        %1439 = vmatpush.bf16.msra.mxu0 %v1424
        %1440 = vmatpush.bf16.msra.mxu0 %v1423
        %1441 = vmatpush.bf16.msra.mxu0 %v1422
        %1442 = vmatmul.bf16.gmra.mxu0 %v1432
        %v1443 = vpop.f32.mrf.mxu0
        %v1444 = vadd.f32 %v1404, %v1443
        %v1445 = vpop.f32.mrf.mxu0
        %1446 = vdwg.mxu0
        %v1447 = vadd.f32 %v1444, %v1346
        %v1448 = vld [vmem:[%s1037] sm:$0x1]
        %v1449 = vld [vmem:[%s1040] sm:$0x1]
        %v1450 = vsel %vm1126, %v1447, 0.0
        %1451 = vadd.xlane.f32.xlu0 %v1450
        %v1452 = vpop.xlane.xlu0 %1451
        %v1453 = vmul.f32 %v1452, %v1319
        %v1454 = vsub.f32 %v1447, %v1453
        %v1455 = vmul.f32 %v1454, %v1454
        %v1456 = vsel %vm1126, %v1455, 0.0
        %1457 = vadd.xlane.f32.xlu0 %v1456
        %v1458 = vpop.xlane.xlu0 %1457
        %v1459 = vmul.f32 %v1458, %v1319
        %v1460 = vadd.f32 %v1459, 1e-12
        %v1461 = vrsqrt.pop %v1460
        %v1462 = vmul.f32 %v1461, %v1460
        %v1463 = vmul.f32 %v1462, %v1461
        %v1464 = vmul.f32 0.5, %v1463
        %v1465 = vsub.f32 1.5, %v1464
        %v1466 = vmul.f32 %v1461, %v1465
        %vm1467 = vweird.f32 %v1460
        %vm1468 = vweird.f32 %v1461
        %vm1469 = vmor %vm1467, %vm1468
        %v1470 = vsel %vm1469, %v1461, %v1466
        %v1471 = vmul.f32 %v1454, %v1470
        %v1473 = vperm.slane %v1448, 0
        %v1475 = vmul.f32 %v1471, %v1473
        %v1477 = vperm.slane %v1449, 0
        %v1479 = vadd.f32 %v1475, %v1477
        %1480 = vst.msk [vmem:[#allocation2] sm:$0xff] %vm1126, %v1479
        %p1481 = scmp.eq.s32.totalorder %s45, 1
        // Predicated region
        $region137: #{_lambda_.1} parent=107 // pred_check
          %p1482 = pneg %p1481
        $region138: #{_lambda_.1} parent=107 // pred_check_branch
          %1484 = sbr.rel (%p1482) target = $region140
        $region139: #{_lambda_.1} parent=107 // pred_region
          %v1485 = vld [vmem:[%s844] sm:$0xff]
          %v1486 = vadd.f32 %v1479, %v1485
          %v1487 = vpack.c.bf16 %v1486, %v1486
          %v1488 = vld [vmem:[#allocation11] sm:$0xf]
          %v1489 = vld [vmem:[#allocation11 + $0x4] sm:$0xf]
          %v1490 = vld [vmem:[#allocation11 + $0x8] sm:$0xf]
          %v1491 = vld [vmem:[#allocation11 + $0xc] sm:$0xf]
          %v1492 = vld [vmem:[%s21] sm:$0x1]
          %v1494 = vperm.slane %v1492, 0
          %v1500 = vunpack.c.l.b16 %v1488
          %v1501 = vunpack.c.l.b16 %v1489
          %v1502 = vunpack.c.l.b16 %v1490
          %v1503 = vunpack.c.l.b16 %v1491
          %v1504 = vpack.c.b16 %v1501, %v1500
          %v1505 = vpack.c.b16 %v1503, %v1502
          %v1509 = vsel %vm1126, %v1487, 0
          %1511 = vmatpush.bf16.msra.mxu0 0
          %1512 = vmatpush.bf16.msra.mxu0 0
          %1513 = vmatpush.bf16.msra.mxu0 0
          %1514 = vmatpush.bf16.msra.mxu0 0
          %1515 = vmatpush.bf16.msra.mxu0 0
          %1516 = vmatpush.bf16.msra.mxu0 0
          %1517 = vmatpush.bf16.msra.mxu0 %v1505
          %1518 = vmatpush.bf16.msra.mxu0 %v1504
          %1519 = vmatmul.bf16.gmra.mxu0 %v1509
          %v1520 = vpop.f32.mrf.mxu0
          %v1521 = vadd.f32 %v1494, %v1520
          %v1522 = vpop.f32.mrf.mxu0
          %1523 = vdwg.mxu0
          %1524 = vst [vmem:[%s1000] sm:$0xff] %v1521
        $region140: #{_lambda_.1} parent=107 // pred_fallthru
          _
        %s1525 = sand.u32 %s602, 1
        %s1526 = scalar_lea.sflag [#allocation5], %s1525
        %s1527 = sand.u32 %s602, 1
        %s1528 = smul.addr %s1527, 8
        %s1529 = scalar_lea.vmem [#allocation12], %s1528
        // Predicated region
        $region141: #{_lambda_.1} parent=107 // pred_check
          %p1530 = pneg %p612
        $region142: #{_lambda_.1} parent=107 // pred_check_branch
          %1532 = sbr.rel (%p1530) target = $region144
        $region143: #{_lambda_.1} parent=107 // pred_region
          %1534 = vsyncadd %s1526, 0
          %s1535 = smul.addr %s44, 8
          %s1536 = scalar_lea.hbm %s22, %s1535
          %s1538 = sshll.u32 %s1529, 4
          %s1539 = int_to_ptr.vmem [resolvable:$true] %s1538
          %s1540 = sshll.u32 %s1536, 4
          %s1541 = int_to_ptr.hbm [resolvable:$true] %s1540
          %1543 = dma.vmem_to_hbm [thread:$0]  %s1539, 128, %s1541, %s1526
        $region144: #{_lambda_.1} parent=107 // pred_fallthru
          _
      $region108: #{_lambda_.1} parent=5 // pred_fallthru
        _
      %p1544 = scmp.le.s32.totalorder 2, %s35
      // Predicated region
      $region145: #{_lambda_.1} parent=5 // pred_check
        %p1545 = pneg %p1544
      $region146: #{_lambda_.1} parent=5 // pred_check_branch
        %1547 = sbr.rel (%p1545) target = $region148
      $region147: #{_lambda_.1} parent=5 // pred_region
        %s1548 = ssub.s32 %s35, 2
        // Predicated region
        $region149: #{_lambda_.1} parent=147 // pred_check
          %p1549 = pneg %p618
        $region150: #{_lambda_.1} parent=147 // pred_check_branch
          %1551 = sbr.rel (%p1549) target = $region152
        $region151: #{_lambda_.1} parent=147 // pred_region
          %s1552 = sand.u32 %s603, 1
          %s1553 = scalar_lea.sflag [#allocation5], %s1552
          %s1554 = sand.u32 %s603, 1
          %s1555 = smul.addr %s1554, 8
          %s1556 = scalar_lea.vmem [#allocation12], %s1555
          %1558 = dma.done %s1553, 128
        $region152: #{_lambda_.1} parent=147 // pred_fallthru
          _
      $region148: #{_lambda_.1} parent=5 // pred_fallthru
        _
    $region6: #{_lambda_.1} parent=1 // loop_footer
      %s39 = sadd.s32 1, %s35
    $region7: #{_lambda_.1} parent=1 // loop_footer_branch
      %34 = sbr.rel target = $region3
    $region8: #{_lambda_.1} parent=1 // loop_exit
      _
    %1559 = vsyncpa [#allocation4], 1
    %s1560 = scalar_lea.sflag [#allocation4], 1
    %1561 = vsyncpa %s1560, 1
    %1562 = vsyncpa [#allocation7], 1
    %1563 = vsyncpa [#allocation5], 1
    %s1564 = scalar_lea.sflag [#allocation5], 1
    %1565 = vsyncpa %s1564, 1

</llo_original>
